<compile_context>
chip_gen: v7x
topology: tpu7x:2x2x1
jax: 0.10.0
libtpu: 0.0.40
codegen_flags: <defaults>
</compile_context>

<pallas_src>
import functools

import jax
import jax.numpy as jnp
from jax.experimental import pallas as pl
from jax.experimental.pallas import tpu as pltpu

_K = 3  # BasicBlock convs are 3x3 with padding 1


# ---------------------------------------------------------------------------
# In-kernel helpers (operate on in-VMEM values; no HBM traffic)
# ---------------------------------------------------------------------------
def _taps_stride1(a3, Ho, Wo, C):
    """The 9 'same'-padded 3x3 tap views of a stride-1 activation (Ho, Wo, C)."""
    zr = jnp.zeros((1, Wo, C), a3.dtype)
    ap = jnp.concatenate([zr, a3, zr], axis=0)              # pad H
    zc = jnp.zeros((Ho + 2, 1, C), a3.dtype)
    ap = jnp.concatenate([zc, ap, zc], axis=1)              # pad W
    return [ap[kh:kh + Ho, kw:kw + Wo, :]
            for kh in range(_K) for kw in range(_K)]


def _taps_strided(aq, Ho, Wo, sC, s):
    """The 9 tap views of a 3x3 / stride-s conv taken from the phase-packed
    activation aq[i, p, j, q*Cin + c] == x[s*i + p, s*j + q, c].  Column stride
    phases are folded into zero-padded packed weights, so every tap is a single
    contiguous slice over all s*Cin packed channels (no strided loads)."""
    zr = jnp.zeros((1, s, Wo, sC), aq.dtype)
    ap = jnp.concatenate([zr, aq], axis=0)                  # top 'same' padding
    zc = jnp.zeros((Ho + 1, s, 1, sC), aq.dtype)
    ap = jnp.concatenate([zc, ap], axis=2)                  # left 'same' padding
    taps = []
    for kh in range(_K):
        jr, pr = divmod(kh - 1 + s, s)                      # row block offset / phase
        for kw in range(_K):
            jc = (kw - 1 + s) // s                          # padded packed-col offset
            taps.append(ap[jr:jr + Ho, pr, jc:jc + Wo, :])
    return taps


def _basic_block(a, Hin, Win, Cin, s, Cout, w1_ref, w2_ref, b_ref):
    """Fused BasicBlock: relu(bn2(conv2(relu(bn1(conv1(x))))) + shortcut(x)).

    `a` is (Hin, Win, Cin) for s == 1, or the phase-packed
    (Hin//s, s, Win//s, s*Cin) for s > 1.  Returns (Ho*Wo, Cout) bf16.
    Each conv is ONE im2col matmul; the shortcut (1x1 conv / identity) is
    folded into the conv2 contraction (extra rows of w2_ref).
    """
    Ho, Wo = Hin // s, Win // s
    if s == 1:
        taps1 = _taps_stride1(a, Ho, Wo, Cin)
        res = a                                             # residual source
        Ceff = Cin
    else:
        Ceff = s * Cin
        taps1 = _taps_strided(a, Ho, Wo, Ceff, s)
        res = a[:, 0, :, :]                                 # row-phase-0 sample

    # conv1 + folded bn1 + relu: one (Ho*Wo, 9*Ceff) x (9*Ceff, Cout) matmul.
    p1 = jnp.concatenate(taps1, axis=-1).reshape(Ho * Wo, _K * _K * Ceff)
    h = jnp.dot(p1, w1_ref[...], preferred_element_type=jnp.float32)
    h = jnp.maximum(h + b_ref[0:1, :], 0.0)
    h3 = h.astype(res.dtype).reshape(Ho, Wo, Cout)

    # conv2 + folded bn2 + shortcut + relu: one matmul with the residual
    # appended to the contraction (w2_ref carries the packed 1x1-conv rows or
    # an identity block, plus bn_sc bias folded into b_ref[1]).
    taps2 = _taps_stride1(h3, Ho, Wo, Cout)
    p2 = jnp.concatenate(taps2 + [res], axis=-1)
    p2 = p2.reshape(Ho * Wo, _K * _K * Cout + Ceff)
    y = jnp.dot(p2, w2_ref[...], preferred_element_type=jnp.float32)
    y = jnp.maximum(y + b_ref[1:2, :], 0.0)
    return y.astype(res.dtype)                              # (Ho*Wo, Cout)


def _layer_kernel(x_ref, *refs, cfgs):
    """One grid step == one image; all blocks run back-to-back with the
    activation held in VMEM/vregs (never written back to HBM between blocks)."""
    out_ref = refs[-1]
    wrefs = refs[:-1]
    a = x_ref[0]
    for bi, (Hin, Win, Cin, s, Cout) in enumerate(cfgs):
        if bi > 0:
            a = a.reshape(Hin, Win, Cin)                    # (Ho*Wo,C) -> (Ho,Wo,C)
        elif s > 1:
            # wrapper passed the first block's input W-phase packed: split H.
            a = a.reshape(Hin // s, s, Win // s, s * Cin)
        w1, w2, b = wrefs[3 * bi], wrefs[3 * bi + 1], wrefs[3 * bi + 2]
        a = _basic_block(a, Hin, Win, Cin, s, Cout, w1, w2, b)
    out_ref[0] = a                                          # (Ho*Wo, Cout) bf16


# ---------------------------------------------------------------------------
# Layer wrapper (single pallas_call for the whole block stack)
# ---------------------------------------------------------------------------
def layer_forward(x, block_params, strides):
    """x: (N, H, W, C) bf16 NHWC -> (N, H/s0, W/s0, Cout) bf16."""
    N, H, W, C0 = x.shape
    strides = tuple(int(s) for s in strides)
    assert all(s == 1 for s in strides[1:]), "only the first block may be strided"
    s0 = strides[0]
    assert H % s0 == 0 and W % s0 == 0

    cfgs, args, in_specs = [], [], []
    Hc, Wc, Cc = H, W, C0
    for bp, s in zip(block_params, strides):
        Cout = int(bp["B"].shape[-1])
        cfgs.append((Hc, Wc, Cc, s, Cout))
        for name in ("W1", "W2", "B"):
            args.append(bp[name])
            in_specs.append(pl.BlockSpec(bp[name].shape, lambda n: (0, 0)))
        Hc, Wc, Cc = Hc // s, Wc // s, Cout

    # Free row-major view: fold the W stride phase of the first block into the
    # channel (lane) dim so the kernel only needs contiguous slices.
    xq = x if s0 == 1 else x.reshape(N, H, W // s0, s0 * C0)

    y = pl.pallas_call(
        functools.partial(_layer_kernel, cfgs=tuple(cfgs)),
        out_shape=jax.ShapeDtypeStruct((N, Hc * Wc, Cc), x.dtype),
        grid=(N,),
        in_specs=[pl.BlockSpec((1,) + tuple(xq.shape[1:]),
                               lambda n: (n, 0, 0, 0))] + in_specs,
        out_specs=pl.BlockSpec((1, Hc * Wc, Cc), lambda n: (n, 0, 0)),
        compiler_params=pltpu.CompilerParams(
            dimension_semantics=("parallel",)),   # N=2 -> both v7x TensorCores
    )(xq, *args)
    return y.reshape(N, Hc, Wc, Cc)                         # free view back to NHWC


# ---------------------------------------------------------------------------
# Parameter init (deterministic) + BN folding / im2col & stride-phase packing
# ---------------------------------------------------------------------------
def _fold_bn(gamma, beta, mean, var, eps=1e-5):
    scale = gamma / jnp.sqrt(var + eps)
    return scale, beta - mean * scale


def _init_bn(key, c):
    k1, k2, k3, k4 = jax.random.split(key, 4)
    gamma = 1.0 + 0.1 * jax.random.normal(k1, (c,), jnp.float32)
    beta = 0.1 * jax.random.normal(k2, (c,), jnp.float32)
    mean = 0.05 * jax.random.normal(k3, (c,), jnp.float32)
    var = 1.0 + 0.2 * jax.random.uniform(k4, (c,), jnp.float32)
    return _fold_bn(gamma, beta, mean, var)


def init_block_params(key, cin, cout, stride):
    ks = jax.random.split(key, 6)
    p = {"w1": 0.1 * jax.random.normal(ks[0], (_K, _K, cin, cout), jnp.float32),
         "w2": 0.1 * jax.random.normal(ks[2], (_K, _K, cout, cout), jnp.float32)}
    p["scale1"], p["bias1"] = _init_bn(ks[1], cout)
    p["scale2"], p["bias2"] = _init_bn(ks[3], cout)
    if stride != 1 or cin != cout:
        p["w_sc"] = 0.1 * jax.random.normal(ks[4], (1, 1, cin, cout), jnp.float32)
        p["scale_sc"], p["bias_sc"] = _init_bn(ks[5], cout)
    return p


def fold_and_pack_block_params(p, stride):
    """Fold inference-mode BN into the conv weights (bf16), fold the stride
    column phases of conv1 / shortcut into zero weight rows, reshape to the
    im2col contraction layout and append the shortcut (1x1 conv or identity)
    rows below the conv2 rows so conv2+bn2+residual is one matmul."""
    s = int(stride)
    cin, cout = p["w1"].shape[2], p["w1"].shape[3]
    has_sc = "w_sc" in p
    assert has_sc or (s == 1 and cin == cout), \
        "identity shortcut requires stride == 1 and matching channel counts"

    w1f = (p["w1"] * p["scale1"]).astype(jnp.bfloat16)          # (3,3,cin,cout)
    w2f = (p["w2"] * p["scale2"]).astype(jnp.bfloat16)          # (3,3,cout,cout)
    b1 = p["bias1"].astype(jnp.float32)
    b2 = p["bias2"].astype(jnp.float32)

    # conv1: fold column stride phases into zero rows of packed weights.
    if s == 1:
        w1p = w1f
    else:
        w1p = jnp.zeros((_K, _K, s * cin, cout), w1f.dtype)
        for kw in range(_K):
            pc = (kw - 1 + s) % s                               # used column phase
            w1p = w1p.at[:, kw, pc * cin:(pc + 1) * cin, :].set(w1f[:, kw])
    W1 = w1p.reshape(_K * _K * w1p.shape[2], cout)

    # conv2 + residual: append the residual contraction rows.
    b2tot = b2
    if has_sc:
        wscf = (p["w_sc"] * p["scale_sc"]).astype(jnp.bfloat16).reshape(cin, cout)
        wres = wscf if s == 1 else jnp.concatenate(
            [wscf, jnp.zeros(((s - 1) * cin, cout), wscf.dtype)], axis=0)
        b2tot = b2 + p["bias_sc"].astype(jnp.float32)
    else:
        wres = jnp.eye(cout, dtype=jnp.bfloat16)                # identity shortcut
    W2 = jnp.concatenate([w2f.reshape(_K * _K * cout, cout), wres], axis=0)

    fp = {"W1": W1, "W2": W2, "B": jnp.stack([b1, b2tot]),
          # unfolded copies kept only for the pure-JAX reference check
          "w1f": w1f, "w2f": w2f, "b1": b1, "b2": b2}
    if has_sc:
        fp["wscf"] = wscf.reshape(1, 1, cin, cout)
        fp["bsc"] = p["bias_sc"].astype(jnp.float32)
    return fp


# ---------------------------------------------------------------------------
# Pure-JAX reference (same folded bf16 weights / casts -> tight comparison)
# ---------------------------------------------------------------------------
def _conv_ref(x, w, bias, stride, relu, residual=None):
    pad = (w.shape[0] - 1) // 2
    y = jax.lax.conv_general_dilated(
        x, w, (stride, stride), [(pad, pad), (pad, pad)],
        dimension_numbers=("NHWC", "HWIO", "NHWC"),
        preferred_element_type=jnp.float32)
    y = y + bias
    if residual is not None:
        y = y + residual.astype(jnp.float32)
    if relu:
        y = jnp.maximum(y, 0.0)
    return y


def _block_ref(x, fp, stride):
    h = _conv_ref(x, fp["w1f"], fp["b1"], stride, True).astype(jnp.bfloat16)
    sc = _conv_ref(x, fp["wscf"], fp["bsc"], stride, False) if "wscf" in fp else x
    y = _conv_ref(h, fp["w2f"], fp["b2"], 1, True, residual=sc)
    return y.astype(jnp.bfloat16)


def _layer_ref(x, params, strides):
    for fp, s in zip(params, strides):
        x = _block_ref(x, fp, s)
    return x


# ---------------------------------------------------------------------------
if __name__ == "__main__":
    # Layer(Block=BasicBlock, in_channels=4, channels=8, stride=2, count=2)
    in_channels, channels, stride, count = 4, 8, 2, 2
    N, H, W = 2, 16, 16

    key = jax.random.PRNGKey(0)
    kx, kp = jax.random.split(key)

    # PyTorch-convention NCHW input -> NHWC (channels on the TPU lane dim).
    x_nchw = jax.random.normal(kx, (N, in_channels, H, W), jnp.float32)
    x = jnp.transpose(x_nchw, (0, 2, 3, 1)).astype(jnp.bfloat16)

    params, strides, cin = [], [], in_channels
    for i in range(count):
        s = stride if i == 0 else 1
        kp, kb = jax.random.split(kp)
        raw = init_block_params(kb, cin, channels, s)
        params.append(fold_and_pack_block_params(raw, s))
        strides.append(s)
        cin = channels
    strides = tuple(strides)

    fwd = jax.jit(functools.partial(layer_forward, strides=strides))
    out = jax.block_until_ready(fwd(x, params))

    ref = _layer_ref(x, params, strides)
    assert out.shape == (N, H // stride, W // stride, channels), out.shape
    err = float(jnp.max(jnp.abs(out.astype(jnp.float32) - ref.astype(jnp.float32))))
    assert err < 5e-2, err

    print("KERNEL_OK")
</pallas_src>

<mosaic_0001>
module attributes {stable_mosaic.version = 11 : i64} {
  func.func @_layer_kernel(%arg0: i32, %arg1: memref<1x16x8x8xbf16, #tpu.memory_space<vmem>>, %arg2: memref<72x8xbf16, #tpu.memory_space<vmem>>, %arg3: memref<80x8xbf16, #tpu.memory_space<vmem>>, %arg4: memref<2x8xf32, #tpu.memory_space<vmem>>, %arg5: memref<72x8xbf16, #tpu.memory_space<vmem>>, %arg6: memref<80x8xbf16, #tpu.memory_space<vmem>>, %arg7: memref<2x8xf32, #tpu.memory_space<vmem>>, %arg8: memref<1x64x8xbf16, #tpu.memory_space<vmem>>) attributes {dimension_semantics = [#tpu.dimension_semantics<parallel>], iteration_bounds = array<i64: 2>, scalar_prefetch = 0 : i64, scratch_operands = 0 : i64, tpu.core_type = #tpu.core_type<tc>, window_params = [{transform_indices = @transform_0, window_bounds = array<i64: 1, 16, 8, 8>}, {pipeline_mode = #tpu.pipeline_mode<synchronous>, transform_indices = @transform_1, window_bounds = array<i64: 72, 8>}, {pipeline_mode = #tpu.pipeline_mode<synchronous>, transform_indices = @transform_2, window_bounds = array<i64: 80, 8>}, {pipeline_mode = #tpu.pipeline_mode<synchronous>, transform_indices = @transform_3, window_bounds = array<i64: 2, 8>}, {pipeline_mode = #tpu.pipeline_mode<synchronous>, transform_indices = @transform_4, window_bounds = array<i64: 72, 8>}, {pipeline_mode = #tpu.pipeline_mode<synchronous>, transform_indices = @transform_5, window_bounds = array<i64: 80, 8>}, {pipeline_mode = #tpu.pipeline_mode<synchronous>, transform_indices = @transform_6, window_bounds = array<i64: 2, 8>}, {transform_indices = @transform_7, window_bounds = array<i64: 1, 64, 8>}]} {
    %c0 = arith.constant 0 : index
    %c0_0 = arith.constant 0 : index
    %c0_1 = arith.constant 0 : index
    %c0_2 = arith.constant 0 : index
    %0 = vector.load %arg1[%c0, %c0_0, %c0_1, %c0_2] : memref<1x16x8x8xbf16, #tpu.memory_space<vmem>>, vector<1x16x8x8xbf16>
    %1 = vector.shape_cast %0 : vector<1x16x8x8xbf16> to vector<16x8x8xbf16>
    %2 = vector.shape_cast %1 : vector<16x8x8xbf16> to vector<8x2x8x8xbf16>
    %cst = arith.constant 0.000000e+00 : bf16
    %3 = vector.broadcast %cst : bf16 to vector<1x2x8x8xbf16>
    %4 = tpu.concatenate %3, %2 in 0 : vector<1x2x8x8xbf16>, vector<8x2x8x8xbf16> -> vector<9x2x8x8xbf16>
    %cst_3 = arith.constant 0.000000e+00 : bf16
    %5 = vector.broadcast %cst_3 : bf16 to vector<9x2x1x8xbf16>
    %6 = tpu.concatenate %5, %4 in 2 : vector<9x2x1x8xbf16>, vector<9x2x8x8xbf16> -> vector<9x2x9x8xbf16>
    %7 = vector.extract_strided_slice %6 {offsets = [0, 1, 0, 0], sizes = [8, 1, 8, 8], strides = [1, 1, 1, 1]} : vector<9x2x9x8xbf16> to vector<8x1x8x8xbf16>
    %8 = vector.shape_cast %7 : vector<8x1x8x8xbf16> to vector<8x8x8xbf16>
    %9 = vector.extract_strided_slice %6 {offsets = [0, 1, 1, 0], sizes = [8, 1, 8, 8], strides = [1, 1, 1, 1]} : vector<9x2x9x8xbf16> to vector<8x1x8x8xbf16>
    %10 = vector.shape_cast %9 : vector<8x1x8x8xbf16> to vector<8x8x8xbf16>
    %11 = vector.extract_strided_slice %6 {offsets = [0, 1, 1, 0], sizes = [8, 1, 8, 8], strides = [1, 1, 1, 1]} : vector<9x2x9x8xbf16> to vector<8x1x8x8xbf16>
    %12 = vector.shape_cast %11 : vector<8x1x8x8xbf16> to vector<8x8x8xbf16>
    %13 = vector.extract_strided_slice %6 {offsets = [1, 0, 0, 0], sizes = [8, 1, 8, 8], strides = [1, 1, 1, 1]} : vector<9x2x9x8xbf16> to vector<8x1x8x8xbf16>
    %14 = vector.shape_cast %13 : vector<8x1x8x8xbf16> to vector<8x8x8xbf16>
    %15 = vector.extract_strided_slice %6 {offsets = [1, 0, 1, 0], sizes = [8, 1, 8, 8], strides = [1, 1, 1, 1]} : vector<9x2x9x8xbf16> to vector<8x1x8x8xbf16>
    %16 = vector.shape_cast %15 : vector<8x1x8x8xbf16> to vector<8x8x8xbf16>
    %17 = vector.extract_strided_slice %6 {offsets = [1, 0, 1, 0], sizes = [8, 1, 8, 8], strides = [1, 1, 1, 1]} : vector<9x2x9x8xbf16> to vector<8x1x8x8xbf16>
    %18 = vector.shape_cast %17 : vector<8x1x8x8xbf16> to vector<8x8x8xbf16>
    %19 = vector.extract_strided_slice %6 {offsets = [1, 1, 0, 0], sizes = [8, 1, 8, 8], strides = [1, 1, 1, 1]} : vector<9x2x9x8xbf16> to vector<8x1x8x8xbf16>
    %20 = vector.shape_cast %19 : vector<8x1x8x8xbf16> to vector<8x8x8xbf16>
    %21 = vector.extract_strided_slice %6 {offsets = [1, 1, 1, 0], sizes = [8, 1, 8, 8], strides = [1, 1, 1, 1]} : vector<9x2x9x8xbf16> to vector<8x1x8x8xbf16>
    %22 = vector.shape_cast %21 : vector<8x1x8x8xbf16> to vector<8x8x8xbf16>
    %23 = vector.extract_strided_slice %6 {offsets = [1, 1, 1, 0], sizes = [8, 1, 8, 8], strides = [1, 1, 1, 1]} : vector<9x2x9x8xbf16> to vector<8x1x8x8xbf16>
    %24 = vector.shape_cast %23 : vector<8x1x8x8xbf16> to vector<8x8x8xbf16>
    %25 = vector.extract_strided_slice %2 {offsets = [0, 0, 0, 0], sizes = [8, 1, 8, 8], strides = [1, 1, 1, 1]} : vector<8x2x8x8xbf16> to vector<8x1x8x8xbf16>
    %26 = vector.shape_cast %25 : vector<8x1x8x8xbf16> to vector<8x8x8xbf16>
    %27 = tpu.concatenate %8, %10, %12, %14, %16, %18, %20, %22, %24 in 2 : vector<8x8x8xbf16>, vector<8x8x8xbf16>, vector<8x8x8xbf16>, vector<8x8x8xbf16>, vector<8x8x8xbf16>, vector<8x8x8xbf16>, vector<8x8x8xbf16>, vector<8x8x8xbf16>, vector<8x8x8xbf16> -> vector<8x8x72xbf16>
    %28 = vector.shape_cast %27 : vector<8x8x72xbf16> to vector<64x72xbf16>
    %c0_4 = arith.constant 0 : index
    %c0_5 = arith.constant 0 : index
    %29 = vector.load %arg2[%c0_4, %c0_5] : memref<72x8xbf16, #tpu.memory_space<vmem>>, vector<72x8xbf16>
    %cst_6 = arith.constant dense<0.000000e+00> : vector<64x8xf32>
    %30 = tpu.matmul %28, %29, %cst_6 {dimension_numbers = #tpu.dot_dimension_numbers<[1], [0], [0], [1], [0, 0, 1, 1], [], []>} : vector<64x72xbf16>, vector<72x8xbf16>, vector<64x8xf32> -> vector<64x8xf32>
    %c0_7 = arith.constant 0 : index
    %c0_8 = arith.constant 0 : index
    %31 = vector.load %arg4[%c0_7, %c0_8] : memref<2x8xf32, #tpu.memory_space<vmem>>, vector<1x8xf32>
    %32 = vector.broadcast %31 : vector<1x8xf32> to vector<64x8xf32>
    %33 = arith.addf %30, %32 : vector<64x8xf32>
    %cst_9 = arith.constant 0.000000e+00 : f32
    %34 = vector.broadcast %cst_9 : f32 to vector<64x8xf32>
    %35 = arith.maximumf %33, %34 : vector<64x8xf32>
    %36 = arith.truncf %35 : vector<64x8xf32> to vector<64x8xbf16>
    %37 = vector.shape_cast %36 : vector<64x8xbf16> to vector<8x8x8xbf16>
    %cst_10 = arith.constant 0.000000e+00 : bf16
    %38 = vector.broadcast %cst_10 : bf16 to vector<1x8x8xbf16>
    %39 = tpu.concatenate %38, %37, %38 in 0 : vector<1x8x8xbf16>, vector<8x8x8xbf16>, vector<1x8x8xbf16> -> vector<10x8x8xbf16>
    %cst_11 = arith.constant 0.000000e+00 : bf16
    %40 = vector.broadcast %cst_11 : bf16 to vector<10x1x8xbf16>
    %41 = tpu.concatenate %40, %39, %40 in 1 : vector<10x1x8xbf16>, vector<10x8x8xbf16>, vector<10x1x8xbf16> -> vector<10x10x8xbf16>
    %42 = vector.extract_strided_slice %41 {offsets = [0, 0, 0], sizes = [8, 8, 8], strides = [1, 1, 1]} : vector<10x10x8xbf16> to vector<8x8x8xbf16>
    %43 = vector.extract_strided_slice %41 {offsets = [0, 1, 0], sizes = [8, 8, 8], strides = [1, 1, 1]} : vector<10x10x8xbf16> to vector<8x8x8xbf16>
    %44 = vector.extract_strided_slice %41 {offsets = [0, 2, 0], sizes = [8, 8, 8], strides = [1, 1, 1]} : vector<10x10x8xbf16> to vector<8x8x8xbf16>
    %45 = vector.extract_strided_slice %41 {offsets = [1, 0, 0], sizes = [8, 8, 8], strides = [1, 1, 1]} : vector<10x10x8xbf16> to vector<8x8x8xbf16>
    %46 = vector.extract_strided_slice %41 {offsets = [1, 1, 0], sizes = [8, 8, 8], strides = [1, 1, 1]} : vector<10x10x8xbf16> to vector<8x8x8xbf16>
    %47 = vector.extract_strided_slice %41 {offsets = [1, 2, 0], sizes = [8, 8, 8], strides = [1, 1, 1]} : vector<10x10x8xbf16> to vector<8x8x8xbf16>
    %48 = vector.extract_strided_slice %41 {offsets = [2, 0, 0], sizes = [8, 8, 8], strides = [1, 1, 1]} : vector<10x10x8xbf16> to vector<8x8x8xbf16>
    %49 = vector.extract_strided_slice %41 {offsets = [2, 1, 0], sizes = [8, 8, 8], strides = [1, 1, 1]} : vector<10x10x8xbf16> to vector<8x8x8xbf16>
    %50 = vector.extract_strided_slice %41 {offsets = [2, 2, 0], sizes = [8, 8, 8], strides = [1, 1, 1]} : vector<10x10x8xbf16> to vector<8x8x8xbf16>
    %51 = tpu.concatenate %42, %43, %44, %45, %46, %47, %48, %49, %50, %26 in 2 : vector<8x8x8xbf16>, vector<8x8x8xbf16>, vector<8x8x8xbf16>, vector<8x8x8xbf16>, vector<8x8x8xbf16>, vector<8x8x8xbf16>, vector<8x8x8xbf16>, vector<8x8x8xbf16>, vector<8x8x8xbf16>, vector<8x8x8xbf16> -> vector<8x8x80xbf16>
    %52 = vector.shape_cast %51 : vector<8x8x80xbf16> to vector<64x80xbf16>
    %c0_12 = arith.constant 0 : index
    %c0_13 = arith.constant 0 : index
    %53 = vector.load %arg3[%c0_12, %c0_13] : memref<80x8xbf16, #tpu.memory_space<vmem>>, vector<80x8xbf16>
    %cst_14 = arith.constant dense<0.000000e+00> : vector<64x8xf32>
    %54 = tpu.matmul %52, %53, %cst_14 {dimension_numbers = #tpu.dot_dimension_numbers<[1], [0], [0], [1], [0, 0, 1, 1], [], []>} : vector<64x80xbf16>, vector<80x8xbf16>, vector<64x8xf32> -> vector<64x8xf32>
    %c1 = arith.constant 1 : index
    %c0_15 = arith.constant 0 : index
    %55 = vector.load %arg4[%c1, %c0_15] : memref<2x8xf32, #tpu.memory_space<vmem>>, vector<1x8xf32>
    %56 = vector.broadcast %55 : vector<1x8xf32> to vector<64x8xf32>
    %57 = arith.addf %54, %56 : vector<64x8xf32>
    %cst_16 = arith.constant 0.000000e+00 : f32
    %58 = vector.broadcast %cst_16 : f32 to vector<64x8xf32>
    %59 = arith.maximumf %57, %58 : vector<64x8xf32>
    %60 = arith.truncf %59 : vector<64x8xf32> to vector<64x8xbf16>
    %61 = vector.shape_cast %60 : vector<64x8xbf16> to vector<8x8x8xbf16>
    %cst_17 = arith.constant 0.000000e+00 : bf16
    %62 = vector.broadcast %cst_17 : bf16 to vector<1x8x8xbf16>
    %63 = tpu.concatenate %62, %61, %62 in 0 : vector<1x8x8xbf16>, vector<8x8x8xbf16>, vector<1x8x8xbf16> -> vector<10x8x8xbf16>
    %cst_18 = arith.constant 0.000000e+00 : bf16
    %64 = vector.broadcast %cst_18 : bf16 to vector<10x1x8xbf16>
    %65 = tpu.concatenate %64, %63, %64 in 1 : vector<10x1x8xbf16>, vector<10x8x8xbf16>, vector<10x1x8xbf16> -> vector<10x10x8xbf16>
    %66 = vector.extract_strided_slice %65 {offsets = [0, 0, 0], sizes = [8, 8, 8], strides = [1, 1, 1]} : vector<10x10x8xbf16> to vector<8x8x8xbf16>
    %67 = vector.extract_strided_slice %65 {offsets = [0, 1, 0], sizes = [8, 8, 8], strides = [1, 1, 1]} : vector<10x10x8xbf16> to vector<8x8x8xbf16>
    %68 = vector.extract_strided_slice %65 {offsets = [0, 2, 0], sizes = [8, 8, 8], strides = [1, 1, 1]} : vector<10x10x8xbf16> to vector<8x8x8xbf16>
    %69 = vector.extract_strided_slice %65 {offsets = [1, 0, 0], sizes = [8, 8, 8], strides = [1, 1, 1]} : vector<10x10x8xbf16> to vector<8x8x8xbf16>
    %70 = vector.extract_strided_slice %65 {offsets = [1, 1, 0], sizes = [8, 8, 8], strides = [1, 1, 1]} : vector<10x10x8xbf16> to vector<8x8x8xbf16>
    %71 = vector.extract_strided_slice %65 {offsets = [1, 2, 0], sizes = [8, 8, 8], strides = [1, 1, 1]} : vector<10x10x8xbf16> to vector<8x8x8xbf16>
    %72 = vector.extract_strided_slice %65 {offsets = [2, 0, 0], sizes = [8, 8, 8], strides = [1, 1, 1]} : vector<10x10x8xbf16> to vector<8x8x8xbf16>
    %73 = vector.extract_strided_slice %65 {offsets = [2, 1, 0], sizes = [8, 8, 8], strides = [1, 1, 1]} : vector<10x10x8xbf16> to vector<8x8x8xbf16>
    %74 = vector.extract_strided_slice %65 {offsets = [2, 2, 0], sizes = [8, 8, 8], strides = [1, 1, 1]} : vector<10x10x8xbf16> to vector<8x8x8xbf16>
    %75 = tpu.concatenate %66, %67, %68, %69, %70, %71, %72, %73, %74 in 2 : vector<8x8x8xbf16>, vector<8x8x8xbf16>, vector<8x8x8xbf16>, vector<8x8x8xbf16>, vector<8x8x8xbf16>, vector<8x8x8xbf16>, vector<8x8x8xbf16>, vector<8x8x8xbf16>, vector<8x8x8xbf16> -> vector<8x8x72xbf16>
    %76 = vector.shape_cast %75 : vector<8x8x72xbf16> to vector<64x72xbf16>
    %c0_19 = arith.constant 0 : index
    %c0_20 = arith.constant 0 : index
    %77 = vector.load %arg5[%c0_19, %c0_20] : memref<72x8xbf16, #tpu.memory_space<vmem>>, vector<72x8xbf16>
    %cst_21 = arith.constant dense<0.000000e+00> : vector<64x8xf32>
    %78 = tpu.matmul %76, %77, %cst_21 {dimension_numbers = #tpu.dot_dimension_numbers<[1], [0], [0], [1], [0, 0, 1, 1], [], []>} : vector<64x72xbf16>, vector<72x8xbf16>, vector<64x8xf32> -> vector<64x8xf32>
    %c0_22 = arith.constant 0 : index
    %c0_23 = arith.constant 0 : index
    %79 = vector.load %arg7[%c0_22, %c0_23] : memref<2x8xf32, #tpu.memory_space<vmem>>, vector<1x8xf32>
    %80 = vector.broadcast %79 : vector<1x8xf32> to vector<64x8xf32>
    %81 = arith.addf %78, %80 : vector<64x8xf32>
    %cst_24 = arith.constant 0.000000e+00 : f32
    %82 = vector.broadcast %cst_24 : f32 to vector<64x8xf32>
    %83 = arith.maximumf %81, %82 : vector<64x8xf32>
    %84 = arith.truncf %83 : vector<64x8xf32> to vector<64x8xbf16>
    %85 = vector.shape_cast %84 : vector<64x8xbf16> to vector<8x8x8xbf16>
    %cst_25 = arith.constant 0.000000e+00 : bf16
    %86 = vector.broadcast %cst_25 : bf16 to vector<1x8x8xbf16>
    %87 = tpu.concatenate %86, %85, %86 in 0 : vector<1x8x8xbf16>, vector<8x8x8xbf16>, vector<1x8x8xbf16> -> vector<10x8x8xbf16>
    %cst_26 = arith.constant 0.000000e+00 : bf16
    %88 = vector.broadcast %cst_26 : bf16 to vector<10x1x8xbf16>
    %89 = tpu.concatenate %88, %87, %88 in 1 : vector<10x1x8xbf16>, vector<10x8x8xbf16>, vector<10x1x8xbf16> -> vector<10x10x8xbf16>
    %90 = vector.extract_strided_slice %89 {offsets = [0, 0, 0], sizes = [8, 8, 8], strides = [1, 1, 1]} : vector<10x10x8xbf16> to vector<8x8x8xbf16>
    %91 = vector.extract_strided_slice %89 {offsets = [0, 1, 0], sizes = [8, 8, 8], strides = [1, 1, 1]} : vector<10x10x8xbf16> to vector<8x8x8xbf16>
    %92 = vector.extract_strided_slice %89 {offsets = [0, 2, 0], sizes = [8, 8, 8], strides = [1, 1, 1]} : vector<10x10x8xbf16> to vector<8x8x8xbf16>
    %93 = vector.extract_strided_slice %89 {offsets = [1, 0, 0], sizes = [8, 8, 8], strides = [1, 1, 1]} : vector<10x10x8xbf16> to vector<8x8x8xbf16>
    %94 = vector.extract_strided_slice %89 {offsets = [1, 1, 0], sizes = [8, 8, 8], strides = [1, 1, 1]} : vector<10x10x8xbf16> to vector<8x8x8xbf16>
    %95 = vector.extract_strided_slice %89 {offsets = [1, 2, 0], sizes = [8, 8, 8], strides = [1, 1, 1]} : vector<10x10x8xbf16> to vector<8x8x8xbf16>
    %96 = vector.extract_strided_slice %89 {offsets = [2, 0, 0], sizes = [8, 8, 8], strides = [1, 1, 1]} : vector<10x10x8xbf16> to vector<8x8x8xbf16>
    %97 = vector.extract_strided_slice %89 {offsets = [2, 1, 0], sizes = [8, 8, 8], strides = [1, 1, 1]} : vector<10x10x8xbf16> to vector<8x8x8xbf16>
    %98 = vector.extract_strided_slice %89 {offsets = [2, 2, 0], sizes = [8, 8, 8], strides = [1, 1, 1]} : vector<10x10x8xbf16> to vector<8x8x8xbf16>
    %99 = tpu.concatenate %90, %91, %92, %93, %94, %95, %96, %97, %98, %61 in 2 : vector<8x8x8xbf16>, vector<8x8x8xbf16>, vector<8x8x8xbf16>, vector<8x8x8xbf16>, vector<8x8x8xbf16>, vector<8x8x8xbf16>, vector<8x8x8xbf16>, vector<8x8x8xbf16>, vector<8x8x8xbf16>, vector<8x8x8xbf16> -> vector<8x8x80xbf16>
    %100 = vector.shape_cast %99 : vector<8x8x80xbf16> to vector<64x80xbf16>
    %c0_27 = arith.constant 0 : index
    %c0_28 = arith.constant 0 : index
    %101 = vector.load %arg6[%c0_27, %c0_28] : memref<80x8xbf16, #tpu.memory_space<vmem>>, vector<80x8xbf16>
    %cst_29 = arith.constant dense<0.000000e+00> : vector<64x8xf32>
    %102 = tpu.matmul %100, %101, %cst_29 {dimension_numbers = #tpu.dot_dimension_numbers<[1], [0], [0], [1], [0, 0, 1, 1], [], []>} : vector<64x80xbf16>, vector<80x8xbf16>, vector<64x8xf32> -> vector<64x8xf32>
    %c1_30 = arith.constant 1 : index
    %c0_31 = arith.constant 0 : index
    %103 = vector.load %arg7[%c1_30, %c0_31] : memref<2x8xf32, #tpu.memory_space<vmem>>, vector<1x8xf32>
    %104 = vector.broadcast %103 : vector<1x8xf32> to vector<64x8xf32>
    %105 = arith.addf %102, %104 : vector<64x8xf32>
    %cst_32 = arith.constant 0.000000e+00 : f32
    %106 = vector.broadcast %cst_32 : f32 to vector<64x8xf32>
    %107 = arith.maximumf %105, %106 : vector<64x8xf32>
    %108 = arith.truncf %107 : vector<64x8xf32> to vector<64x8xbf16>
    %c0_33 = arith.constant 0 : index
    %c0_34 = arith.constant 0 : index
    %c0_35 = arith.constant 0 : index
    %109 = vector.load %arg8[%c0_33, %c0_34, %c0_35] : memref<1x64x8xbf16, #tpu.memory_space<vmem>>, vector<1x64x8xbf16>
    %110 = vector.shape_cast %109 : vector<1x64x8xbf16> to vector<64x8xbf16>
    %111 = vector.shape_cast %108 : vector<64x8xbf16> to vector<1x64x8xbf16>
    tpu.vector_store %arg8[%c0_33, %c0_34, %c0_35], %111 {strides = array<i32>} : memref<1x64x8xbf16, #tpu.memory_space<vmem>>, vector<1x64x8xbf16>,
    return
  }
  func.func @transform_0(%arg0: i32) -> (i32, i32, i32, i32) {
    %c0_i32 = arith.constant 0 : i32
    %c0_i32_0 = arith.constant 0 : i32
    %c0_i32_1 = arith.constant 0 : i32
    %c0_i32_2 = arith.constant 0 : i32
    return %arg0, %c0_i32, %c0_i32_0, %c0_i32_1 : i32, i32, i32, i32
  }
  func.func @transform_1(%arg0: i32) -> (i32, i32) {
    %c0_i32 = arith.constant 0 : i32
    %c0_i32_0 = arith.constant 0 : i32
    %c0_i32_1 = arith.constant 0 : i32
    return %c0_i32, %c0_i32_0 : i32, i32
  }
  func.func @transform_2(%arg0: i32) -> (i32, i32) {
    %c0_i32 = arith.constant 0 : i32
    %c0_i32_0 = arith.constant 0 : i32
    %c0_i32_1 = arith.constant 0 : i32
    return %c0_i32, %c0_i32_0 : i32, i32
  }
  func.func @transform_3(%arg0: i32) -> (i32, i32) {
    %c0_i32 = arith.constant 0 : i32
    %c0_i32_0 = arith.constant 0 : i32
    %c0_i32_1 = arith.constant 0 : i32
    return %c0_i32, %c0_i32_0 : i32, i32
  }
  func.func @transform_4(%arg0: i32) -> (i32, i32) {
    %c0_i32 = arith.constant 0 : i32
    %c0_i32_0 = arith.constant 0 : i32
    %c0_i32_1 = arith.constant 0 : i32
    return %c0_i32, %c0_i32_0 : i32, i32
  }
  func.func @transform_5(%arg0: i32) -> (i32, i32) {
    %c0_i32 = arith.constant 0 : i32
    %c0_i32_0 = arith.constant 0 : i32
    %c0_i32_1 = arith.constant 0 : i32
    return %c0_i32, %c0_i32_0 : i32, i32
  }
  func.func @transform_6(%arg0: i32) -> (i32, i32) {
    %c0_i32 = arith.constant 0 : i32
    %c0_i32_0 = arith.constant 0 : i32
    %c0_i32_1 = arith.constant 0 : i32
    return %c0_i32, %c0_i32_0 : i32, i32
  }
  func.func @transform_7(%arg0: i32) -> (i32, i32, i32) {
    %c0_i32 = arith.constant 0 : i32
    %c0_i32_0 = arith.constant 0 : i32
    %c0_i32_1 = arith.constant 0 : i32
    return %arg0, %c0_i32, %c0_i32_0 : i32, i32, i32
  }
}

</mosaic_0001>

<llo_original>
// kernel: layer_forward.1
$region0: #{layer_forward.1}
  #allocation0 [shape = 'u32[]', space=smem, size = 0x4, offset = 0x4, fixed_abs, tag = 'smem constant byte address 0x4 - core index']
  #allocation1 [shape = 'u32[144,128]{1,0:T(1,128)}', space=vmem, size = 0x12000, scoped, tag = 'internal scratch']
  %s0 = inlined_call_operand.vmem [shape: bf16[2,16,8,8], index: 0, kind: input, shape index: {}]
  %s1 = inlined_call_operand.vmem [shape: bf16[72,8], index: 1, kind: input, shape index: {}]
  %s2 = inlined_call_operand.vmem [shape: bf16[80,8], index: 2, kind: input, shape index: {}]
  %s3 = inlined_call_operand.vmem [shape: f32[2,8], index: 3, kind: input, shape index: {}]
  %s4 = inlined_call_operand.vmem [shape: bf16[72,8], index: 4, kind: input, shape index: {}]
  %s5 = inlined_call_operand.vmem [shape: bf16[80,8], index: 5, kind: input, shape index: {}]
  %s6 = inlined_call_operand.vmem [shape: f32[2,8], index: 6, kind: input, shape index: {}]
  %s7 = inlined_call_operand.hbm [shape: bf16[2,64,8], index: 7, kind: output, shape index: {}]
  %s8 = sld [smem:[#allocation0]]
  $region61: #{layer_forward.1} parent=0
    _
  %s10 = ssub.s32 1, %s8
  %s11 = scalar_select 0, %s10, %s8
  $region1: #{layer_forward.1} parent=0
    #allocation2 [shape = 'u8[32768]{0}', space=vmem, size = 0x8000, scoped, tag = 'output window, operand 0']
    #allocation3 [shape = 's32[2]{0}', space=sflag, size = 0x8, scoped, tag = 'scoped memory for layer_forward.1']
    %12 = vsyncpa [#allocation3], 0
    %s13 = scalar_lea.sflag [#allocation3], 1
    %14 = vsyncpa %s13, 0
    loop: start=0, step=1, limit=4
    $region2: #{layer_forward.1} parent=1 // loop_pre_header
      _
    $region3: #{layer_forward.1} parent=1 // loop_header
      %s16 = sphi 0, %s20
      %p17 = scmp.ge.s32.totalorder %s16, 4
      %s26 = sphi 0, %s28
      %s29 = sphi 0, %s26
      %s30 = sphi 0, %s29
      %s46 = sphi 0, %s30
      %s50 = sphi 0, %s50
      %s52 = sphi 0, %s50
      %s53 = sphi 0, %s52
      %s67 = sphi 0, %s53
      %s71 = sphi 0, %s71
      %s73 = sphi 0, %s71
      %s74 = sphi 0, %s73
      %s88 = sphi 0, %s74
      %s92 = sphi 0, %s92
      %s94 = sphi 0, %s92
      %s95 = sphi 0, %s94
      %s109 = sphi 0, %s95
      %s113 = sphi 0, %s113
      %s115 = sphi 0, %s113
      %s116 = sphi 0, %s115
      %s130 = sphi 0, %s116
      %s134 = sphi 0, %s134
      %s136 = sphi 0, %s134
      %s137 = sphi 0, %s136
      %s151 = sphi 0, %s137
      %s155 = sphi 0, %s155
      %s157 = sphi 0, %s155
      %s158 = sphi 0, %s157
      %s172 = sphi 0, %s158
      %s178 = sphi 0, %s180
      %s181 = sphi 0, %s178
      %s182 = sphi 0, %s181
      %s198 = sphi 0, %s182
    $region4: #{layer_forward.1} parent=1 // loop_header_branch
      %19 = sbr.rel (%p17) target = $region8
    $region5: #{layer_forward.1} parent=1 // loop_body
      %s21 = ssub.s32 %s16, 1
      %s22 = ssub.s32 %s16, 2
      %s23 = sadd.s32 %s16, 1
      %s24 = ssub.s32 %s16, %s23
      %p25 = scmp.eq.s32.totalorder %s24, 0
      %s27 = sadd.s32 %s26, 1
      %s28 = scalar_select %p25, %s26, %s27
      %p31 = pneg %p25
      %p32 = scmp.eq.s32.totalorder %s16, 1
      %p33 = por %p31, %p32
      %p34 = scmp.ne.s32.totalorder %s26, %s29
      %p35 = scmp.eq.s32.totalorder %s16, 0
      %p36 = por %p34, %p35
      %p37 = scmp.ne.s32.totalorder %s26, %s29
      %p38 = scmp.eq.s32.totalorder %s21, 1
      %p39 = por %p37, %p38
      %p40 = scmp.ne.s32.totalorder %s29, %s30
      %p41 = scmp.eq.s32.totalorder %s21, 0
      %p42 = por %p40, %p41
      %p43 = scmp.ne.s32.totalorder %s29, %s30
      %p44 = scmp.eq.s32.totalorder %s22, 1
      %p45 = por %p43, %p44
      %p47 = scmp.ne.s32.totalorder %s30, %s46
      %p48 = scmp.eq.s32.totalorder %s22, 0
      %p49 = por %p47, %p48
      %s51 = sadd.s32 %s50, 1
      %p54 = scmp.eq.s32.totalorder %s16, 1
      %p55 = scmp.ne.s32.totalorder %s50, %s52
      %p56 = scmp.eq.s32.totalorder %s16, 0
      %p57 = por %p55, %p56
      %p58 = scmp.ne.s32.totalorder %s50, %s52
      %p59 = scmp.eq.s32.totalorder %s21, 1
      %p60 = por %p58, %p59
      %p61 = scmp.ne.s32.totalorder %s52, %s53
      %p62 = scmp.eq.s32.totalorder %s21, 0
      %p63 = por %p61, %p62
      %p64 = scmp.ne.s32.totalorder %s52, %s53
      %p65 = scmp.eq.s32.totalorder %s22, 1
      %p66 = por %p64, %p65
      %p68 = scmp.ne.s32.totalorder %s53, %s67
      %p69 = scmp.eq.s32.totalorder %s22, 0
      %p70 = por %p68, %p69
      %s72 = sadd.s32 %s71, 1
      %p75 = scmp.eq.s32.totalorder %s16, 1
      %p76 = scmp.ne.s32.totalorder %s71, %s73
      %p77 = scmp.eq.s32.totalorder %s16, 0
      %p78 = por %p76, %p77
      %p79 = scmp.ne.s32.totalorder %s71, %s73
      %p80 = scmp.eq.s32.totalorder %s21, 1
      %p81 = por %p79, %p80
      %p82 = scmp.ne.s32.totalorder %s73, %s74
      %p83 = scmp.eq.s32.totalorder %s21, 0
      %p84 = por %p82, %p83
      %p85 = scmp.ne.s32.totalorder %s73, %s74
      %p86 = scmp.eq.s32.totalorder %s22, 1
      %p87 = por %p85, %p86
      %p89 = scmp.ne.s32.totalorder %s74, %s88
      %p90 = scmp.eq.s32.totalorder %s22, 0
      %p91 = por %p89, %p90
      %s93 = sadd.s32 %s92, 1
      %p96 = scmp.eq.s32.totalorder %s16, 1
      %p97 = scmp.ne.s32.totalorder %s92, %s94
      %p98 = scmp.eq.s32.totalorder %s16, 0
      %p99 = por %p97, %p98
      %p100 = scmp.ne.s32.totalorder %s92, %s94
      %p101 = scmp.eq.s32.totalorder %s21, 1
      %p102 = por %p100, %p101
      %p103 = scmp.ne.s32.totalorder %s94, %s95
      %p104 = scmp.eq.s32.totalorder %s21, 0
      %p105 = por %p103, %p104
      %p106 = scmp.ne.s32.totalorder %s94, %s95
      %p107 = scmp.eq.s32.totalorder %s22, 1
      %p108 = por %p106, %p107
      %p110 = scmp.ne.s32.totalorder %s95, %s109
      %p111 = scmp.eq.s32.totalorder %s22, 0
      %p112 = por %p110, %p111
      %s114 = sadd.s32 %s113, 1
      %p117 = scmp.eq.s32.totalorder %s16, 1
      %p118 = scmp.ne.s32.totalorder %s113, %s115
      %p119 = scmp.eq.s32.totalorder %s16, 0
      %p120 = por %p118, %p119
      %p121 = scmp.ne.s32.totalorder %s113, %s115
      %p122 = scmp.eq.s32.totalorder %s21, 1
      %p123 = por %p121, %p122
      %p124 = scmp.ne.s32.totalorder %s115, %s116
      %p125 = scmp.eq.s32.totalorder %s21, 0
      %p126 = por %p124, %p125
      %p127 = scmp.ne.s32.totalorder %s115, %s116
      %p128 = scmp.eq.s32.totalorder %s22, 1
      %p129 = por %p127, %p128
      %p131 = scmp.ne.s32.totalorder %s116, %s130
      %p132 = scmp.eq.s32.totalorder %s22, 0
      %p133 = por %p131, %p132
      %s135 = sadd.s32 %s134, 1
      %p138 = scmp.eq.s32.totalorder %s16, 1
      %p139 = scmp.ne.s32.totalorder %s134, %s136
      %p140 = scmp.eq.s32.totalorder %s16, 0
      %p141 = por %p139, %p140
      %p142 = scmp.ne.s32.totalorder %s134, %s136
      %p143 = scmp.eq.s32.totalorder %s21, 1
      %p144 = por %p142, %p143
      %p145 = scmp.ne.s32.totalorder %s136, %s137
      %p146 = scmp.eq.s32.totalorder %s21, 0
      %p147 = por %p145, %p146
      %p148 = scmp.ne.s32.totalorder %s136, %s137
      %p149 = scmp.eq.s32.totalorder %s22, 1
      %p150 = por %p148, %p149
      %p152 = scmp.ne.s32.totalorder %s137, %s151
      %p153 = scmp.eq.s32.totalorder %s22, 0
      %p154 = por %p152, %p153
      %s156 = sadd.s32 %s155, 1
      %p159 = scmp.eq.s32.totalorder %s16, 1
      %p160 = scmp.ne.s32.totalorder %s155, %s157
      %p161 = scmp.eq.s32.totalorder %s16, 0
      %p162 = por %p160, %p161
      %p163 = scmp.ne.s32.totalorder %s155, %s157
      %p164 = scmp.eq.s32.totalorder %s21, 1
      %p165 = por %p163, %p164
      %p166 = scmp.ne.s32.totalorder %s157, %s158
      %p167 = scmp.eq.s32.totalorder %s21, 0
      %p168 = por %p166, %p167
      %p169 = scmp.ne.s32.totalorder %s157, %s158
      %p170 = scmp.eq.s32.totalorder %s22, 1
      %p171 = por %p169, %p170
      %p173 = scmp.ne.s32.totalorder %s158, %s172
      %p174 = scmp.eq.s32.totalorder %s22, 0
      %p175 = por %p173, %p174
      %s176 = ssub.s32 %s16, %s23
      %p177 = scmp.eq.s32.totalorder %s176, 0
      %s179 = sadd.s32 %s178, 1
      %s180 = scalar_select %p177, %s178, %s179
      %p183 = pneg %p177
      %p184 = scmp.eq.s32.totalorder %s16, 1
      %p185 = por %p183, %p184
      %p186 = scmp.ne.s32.totalorder %s178, %s181
      %p187 = scmp.eq.s32.totalorder %s16, 0
      %p188 = por %p186, %p187
      %p189 = scmp.ne.s32.totalorder %s178, %s181
      %p190 = scmp.eq.s32.totalorder %s21, 1
      %p191 = por %p189, %p190
      %p192 = scmp.ne.s32.totalorder %s181, %s182
      %p193 = scmp.eq.s32.totalorder %s21, 0
      %p194 = por %p192, %p193
      %p195 = scmp.ne.s32.totalorder %s181, %s182
      %p196 = scmp.eq.s32.totalorder %s22, 1
      %p197 = por %p195, %p196
      %p199 = scmp.ne.s32.totalorder %s182, %s198
      %p200 = scmp.eq.s32.totalorder %s22, 0
      %p201 = por %p199, %p200
      %p202 = scmp.le.s32.totalorder 1, %s16
      %p203 = scmp.lt.s32.totalorder %s16, 3
      %p204 = pnand %p202, %p203
      %p205 = pneg %p204
      // Predicated region
      $region9: #{layer_forward.1} parent=5 // pred_check
        _
      $region10: #{layer_forward.1} parent=5 // pred_check_branch
        %207 = sbr.rel (%p204) target = $region12
      $region11: #{layer_forward.1} parent=5 // pred_region
        %s208 = ssub.s32 %s16, 1
        // Predicated region
        $region13: #{layer_forward.1} parent=11 // pred_check
          %p209 = pneg %p63
        $region14: #{layer_forward.1} parent=11 // pred_check_branch
          %211 = sbr.rel (%p209) target = $region16
        $region15: #{layer_forward.1} parent=11 // pred_region
          _
        $region16: #{layer_forward.1} parent=11 // pred_fallthru
          _
        // Predicated region
        $region17: #{layer_forward.1} parent=11 // pred_check
          %p212 = pneg %p84
        $region18: #{layer_forward.1} parent=11 // pred_check_branch
          %214 = sbr.rel (%p212) target = $region20
        $region19: #{layer_forward.1} parent=11 // pred_region
          _
        $region20: #{layer_forward.1} parent=11 // pred_fallthru
          _
        // Predicated region
        $region21: #{layer_forward.1} parent=11 // pred_check
          %p215 = pneg %p105
        $region22: #{layer_forward.1} parent=11 // pred_check_branch
          %217 = sbr.rel (%p215) target = $region24
        $region23: #{layer_forward.1} parent=11 // pred_region
          _
        $region24: #{layer_forward.1} parent=11 // pred_fallthru
          _
        // Predicated region
        $region25: #{layer_forward.1} parent=11 // pred_check
          %p218 = pneg %p126
        $region26: #{layer_forward.1} parent=11 // pred_check_branch
          %220 = sbr.rel (%p218) target = $region28
        $region27: #{layer_forward.1} parent=11 // pred_region
          _
        $region28: #{layer_forward.1} parent=11 // pred_fallthru
          _
        // Predicated region
        $region29: #{layer_forward.1} parent=11 // pred_check
          %p221 = pneg %p147
        $region30: #{layer_forward.1} parent=11 // pred_check_branch
          %223 = sbr.rel (%p221) target = $region32
        $region31: #{layer_forward.1} parent=11 // pred_region
          _
        $region32: #{layer_forward.1} parent=11 // pred_fallthru
          _
        // Predicated region
        $region33: #{layer_forward.1} parent=11 // pred_check
          %p224 = pneg %p168
        $region34: #{layer_forward.1} parent=11 // pred_check_branch
          %226 = sbr.rel (%p224) target = $region36
        $region35: #{layer_forward.1} parent=11 // pred_region
          _
        $region36: #{layer_forward.1} parent=11 // pred_fallthru
          _
      $region12: #{layer_forward.1} parent=5 // pred_fallthru
        _
      %p227 = scmp.lt.s32.totalorder %s16, 2
      // Predicated region
      $region37: #{layer_forward.1} parent=5 // pred_check
        %p228 = pneg %p227
      $region38: #{layer_forward.1} parent=5 // pred_check_branch
        %230 = sbr.rel (%p228) target = $region40
      $region39: #{layer_forward.1} parent=5 // pred_region
        // Predicated region
        $region41: #{layer_forward.1} parent=39 // pred_check
          %p231 = pneg %p36
        $region42: #{layer_forward.1} parent=39 // pred_check_branch
          %233 = sbr.rel (%p231) target = $region44
        $region43: #{layer_forward.1} parent=39 // pred_region
          %p234 = scmp.lt.s32.totalorder %s16, 1
          %s235 = scalar_select %p234, %s16, 1
          %s236 = smul.addr %s235, 16
          %s237 = smul.addr %s236, 4
          %s238 = scalar_lea.vmem %s0, %s237
        $region44: #{layer_forward.1} parent=39 // pred_fallthru
          _
      $region40: #{layer_forward.1} parent=5 // pred_fallthru
        _
      %p239 = scmp.le.s32.totalorder 1, %s16
      %p240 = scmp.lt.s32.totalorder %s16, 3
      %p241 = pnand %p239, %p240
      %p242 = pneg %p241
      // Predicated region
      $region45: #{layer_forward.1} parent=5 // pred_check
        _
      $region46: #{layer_forward.1} parent=5 // pred_check_branch
        %244 = sbr.rel (%p241) target = $region48
      $region47: #{layer_forward.1} parent=5 // pred_region
        %s245 = ssub.s32 %s16, 1
        %p246 = scmp.lt.s32.totalorder %s21, 1
        %s247 = scalar_select %p246, %s21, 1
        %s248 = smul.addr %s247, 16
        %s249 = smul.addr %s248, 4
        %s250 = scalar_lea.vmem %s0, %s249
        %p251 = pneg %p42
        %p252 = pneg %p39
        %p253 = pneg %p63
        %p254 = pneg %p60
        %p255 = pneg %p84
        %p256 = pneg %p81
        %p257 = pneg %p105
        %p258 = pneg %p102
        %p259 = pneg %p126
        %p260 = pneg %p123
        %p261 = pneg %p147
        %p262 = pneg %p144
        %p263 = pneg %p168
        %p264 = pneg %p165
        %p265 = pneg %p194
        %p266 = pneg %p191
        %s267 = sand.u32 %s181, 1
        %s268 = scalar_lea.sflag [#allocation3], %s267
        %s269 = sand.u32 %s181, 1
        %s270 = smul.addr %s269, 32
        %s271 = scalar_lea.vmem [#allocation2], %s270
        %p272 = scmp.lt.s32.totalorder %s21, 1
        %s273 = scalar_select %p272, %s21, 1
        %s274 = smul.addr %s273, 16
        %s275 = smul.addr %s274, 4
        %s276 = scalar_lea.vmem %s0, %s275
        %v278 = vld [vmem:[%s276] sm:$0xf]
        %v279 = vld [vmem:[%s276 + $0x4] sm:$0xf]
        %v280 = vld [vmem:[%s276 + $0x8] sm:$0xf]
        %v281 = vld [vmem:[%s276 + $0xc] sm:$0xf]
        %v282 = vld [vmem:[%s276 + $0x10] sm:$0xf]
        %v283 = vld [vmem:[%s276 + $0x14] sm:$0xf]
        %v284 = vld [vmem:[%s276 + $0x18] sm:$0xf]
        %v285 = vld [vmem:[%s276 + $0x1c] sm:$0xf]
        %v286 = vld [vmem:[%s276 + $0x20] sm:$0xf]
        %v287 = vld [vmem:[%s276 + $0x24] sm:$0xf]
        %v288 = vld [vmem:[%s276 + $0x28] sm:$0xf]
        %v289 = vld [vmem:[%s276 + $0x2c] sm:$0xf]
        %v290 = vld [vmem:[%s276 + $0x30] sm:$0xf]
        %v291 = vld [vmem:[%s276 + $0x34] sm:$0xf]
        %v292 = vld [vmem:[%s276 + $0x38] sm:$0xf]
        %v293 = vld [vmem:[%s276 + $0x3c] sm:$0xf]
        %v295 = vshrl.u32 0, 16
        %v297 = vrot.slane %v295, 7
        %v298 = vshll.u32 0, 16
        %v300 = vor.u32 %v297, %v298
        %v302 = vshrl.u32 %v278, 16
        %v304 = vrot.slane %v302, 7
        %v305 = vshll.u32 %v278, 16
        %v307 = vor.u32 %v304, %v305
        %v309 = vshrl.u32 %v279, 16
        %v311 = vrot.slane %v309, 7
        %v312 = vshll.u32 %v279, 16
        %v314 = vor.u32 %v311, %v312
        %v316 = vshrl.u32 %v280, 16
        %v318 = vrot.slane %v316, 7
        %v319 = vshll.u32 %v280, 16
        %v321 = vor.u32 %v318, %v319
        %v323 = vshrl.u32 %v281, 16
        %v325 = vrot.slane %v323, 7
        %v326 = vshll.u32 %v281, 16
        %v328 = vor.u32 %v325, %v326
        %v330 = vshrl.u32 %v282, 16
        %v332 = vrot.slane %v330, 7
        %v333 = vshll.u32 %v282, 16
        %v335 = vor.u32 %v332, %v333
        %v337 = vshrl.u32 %v283, 16
        %v339 = vrot.slane %v337, 7
        %v340 = vshll.u32 %v283, 16
        %v342 = vor.u32 %v339, %v340
        %v344 = vshrl.u32 %v284, 16
        %v346 = vrot.slane %v344, 7
        %v347 = vshll.u32 %v284, 16
        %v349 = vor.u32 %v346, %v347
        %v351 = vshrl.u32 %v285, 16
        %v353 = vrot.slane %v351, 7
        %v354 = vshll.u32 %v285, 16
        %v356 = vor.u32 %v353, %v354
        %v358 = vshrl.u32 %v286, 16
        %v360 = vrot.slane %v358, 7
        %v361 = vshll.u32 %v286, 16
        %v363 = vor.u32 %v360, %v361
        %v365 = vshrl.u32 %v287, 16
        %v367 = vrot.slane %v365, 7
        %v368 = vshll.u32 %v287, 16
        %v370 = vor.u32 %v367, %v368
        %v372 = vshrl.u32 %v288, 16
        %v374 = vrot.slane %v372, 7
        %v375 = vshll.u32 %v288, 16
        %v377 = vor.u32 %v374, %v375
        %v379 = vshrl.u32 %v289, 16
        %v381 = vrot.slane %v379, 7
        %v382 = vshll.u32 %v289, 16
        %v384 = vor.u32 %v381, %v382
        %v386 = vshrl.u32 %v290, 16
        %v388 = vrot.slane %v386, 7
        %v389 = vshll.u32 %v290, 16
        %v391 = vor.u32 %v388, %v389
        %v393 = vshrl.u32 %v291, 16
        %v395 = vrot.slane %v393, 7
        %v396 = vshll.u32 %v291, 16
        %v398 = vor.u32 %v395, %v396
        %v400 = vshrl.u32 %v292, 16
        %v402 = vrot.slane %v400, 7
        %v403 = vshll.u32 %v292, 16
        %v405 = vor.u32 %v402, %v403
        %v407 = vshrl.u32 %v293, 16
        %v409 = vrot.slane %v407, 7
        %v410 = vshll.u32 %v293, 16
        %v412 = vor.u32 %v409, %v410
        %vm430 = vcmask 1040384
        %vm431 = vsmask.f32 256
        %vm432 = vmand %vm430, %vm431
        %v433 = vsel %vm432, 0, %v300
        %v434 = vsel %vm432, 0, %v307
        %v435 = vsel %vm432, 0, %v314
        %v436 = vsel %vm432, 0, %v321
        %v437 = vsel %vm432, 0, %v328
        %v438 = vsel %vm432, 0, %v335
        %v439 = vsel %vm432, 0, %v342
        %v440 = vsel %vm432, 0, %v349
        %v441 = vsel %vm432, 0, %v356
        %v442 = vsel %vm432, 0, %v363
        %v443 = vsel %vm432, 0, %v370
        %v444 = vsel %vm432, 0, %v377
        %v445 = vsel %vm432, 0, %v384
        %v446 = vsel %vm432, 0, %v391
        %v447 = vsel %vm432, 0, %v398
        %v448 = vsel %vm432, 0, %v405
        %v449 = vsel %vm432, 0, %v412
        %v451 = vshrl.u32 %v433, 16
        %v453 = vshll.u32 %v433, 16
        %v455 = vrot.slane %v453, 1
        %v456 = vor.u32 %v451, %v455
        %v458 = vshrl.u32 %v435, 16
        %v460 = vshll.u32 %v435, 16
        %v462 = vrot.slane %v460, 1
        %v463 = vor.u32 %v458, %v462
        %v465 = vshrl.u32 %v437, 16
        %v467 = vshll.u32 %v437, 16
        %v469 = vrot.slane %v467, 1
        %v470 = vor.u32 %v465, %v469
        %v472 = vshrl.u32 %v439, 16
        %v474 = vshll.u32 %v439, 16
        %v476 = vrot.slane %v474, 1
        %v477 = vor.u32 %v472, %v476
        %v479 = vshrl.u32 %v441, 16
        %v481 = vshll.u32 %v441, 16
        %v483 = vrot.slane %v481, 1
        %v484 = vor.u32 %v479, %v483
        %v486 = vshrl.u32 %v443, 16
        %v488 = vshll.u32 %v443, 16
        %v490 = vrot.slane %v488, 1
        %v491 = vor.u32 %v486, %v490
        %v493 = vshrl.u32 %v445, 16
        %v495 = vshll.u32 %v445, 16
        %v497 = vrot.slane %v495, 1
        %v498 = vor.u32 %v493, %v497
        %v500 = vshrl.u32 %v447, 16
        %v502 = vshll.u32 %v447, 16
        %v504 = vrot.slane %v502, 1
        %v505 = vor.u32 %v500, %v504
        %506 = vrot.lane.b32.xlu0 %v456, 8
        %v507 = vpop.permute.xlu0 %506
        %508 = vrot.lane.b32.xlu0 %v463, 8
        %v509 = vpop.permute.xlu0 %508
        %510 = vrot.lane.b32.xlu0 %v470, 8
        %v511 = vpop.permute.xlu0 %510
        %512 = vrot.lane.b32.xlu0 %v477, 8
        %v513 = vpop.permute.xlu0 %512
        %514 = vrot.lane.b32.xlu0 %v484, 8
        %v515 = vpop.permute.xlu0 %514
        %516 = vrot.lane.b32.xlu0 %v491, 8
        %v517 = vpop.permute.xlu0 %516
        %518 = vrot.lane.b32.xlu0 %v498, 8
        %v519 = vpop.permute.xlu0 %518
        %520 = vrot.lane.b32.xlu0 %v505, 8
        %v521 = vpop.permute.xlu0 %520
        %522 = vrot.lane.b32.xlu0 %v456, 16
        %v523 = vpop.permute.xlu0 %522
        %524 = vrot.lane.b32.xlu0 %v463, 16
        %v525 = vpop.permute.xlu0 %524
        %526 = vrot.lane.b32.xlu0 %v470, 16
        %v527 = vpop.permute.xlu0 %526
        %528 = vrot.lane.b32.xlu0 %v477, 16
        %v529 = vpop.permute.xlu0 %528
        %530 = vrot.lane.b32.xlu0 %v484, 16
        %v531 = vpop.permute.xlu0 %530
        %532 = vrot.lane.b32.xlu0 %v491, 16
        %v533 = vpop.permute.xlu0 %532
        %534 = vrot.lane.b32.xlu0 %v498, 16
        %v535 = vpop.permute.xlu0 %534
        %536 = vrot.lane.b32.xlu0 %v505, 16
        %v537 = vpop.permute.xlu0 %536
        %546 = vrot.lane.b32.xlu0 %v434, 24
        %v547 = vpop.permute.xlu0 %546
        %548 = vrot.lane.b32.xlu0 %v436, 24
        %v549 = vpop.permute.xlu0 %548
        %550 = vrot.lane.b32.xlu0 %v438, 24
        %v551 = vpop.permute.xlu0 %550
        %552 = vrot.lane.b32.xlu0 %v440, 24
        %v553 = vpop.permute.xlu0 %552
        %554 = vrot.lane.b32.xlu0 %v442, 24
        %v555 = vpop.permute.xlu0 %554
        %556 = vrot.lane.b32.xlu0 %v444, 24
        %v557 = vpop.permute.xlu0 %556
        %558 = vrot.lane.b32.xlu0 %v446, 24
        %v559 = vpop.permute.xlu0 %558
        %560 = vrot.lane.b32.xlu0 %v448, 24
        %v561 = vpop.permute.xlu0 %560
        %v563 = vshrl.u32 %v434, 16
        %v565 = vshll.u32 %v434, 16
        %v567 = vrot.slane %v565, 1
        %v568 = vor.u32 %v563, %v567
        %v570 = vshrl.u32 %v436, 16
        %v572 = vshll.u32 %v436, 16
        %v574 = vrot.slane %v572, 1
        %v575 = vor.u32 %v570, %v574
        %v577 = vshrl.u32 %v438, 16
        %v579 = vshll.u32 %v438, 16
        %v581 = vrot.slane %v579, 1
        %v582 = vor.u32 %v577, %v581
        %v584 = vshrl.u32 %v440, 16
        %v586 = vshll.u32 %v440, 16
        %v588 = vrot.slane %v586, 1
        %v589 = vor.u32 %v584, %v588
        %v591 = vshrl.u32 %v442, 16
        %v593 = vshll.u32 %v442, 16
        %v595 = vrot.slane %v593, 1
        %v596 = vor.u32 %v591, %v595
        %v598 = vshrl.u32 %v444, 16
        %v600 = vshll.u32 %v444, 16
        %v602 = vrot.slane %v600, 1
        %v603 = vor.u32 %v598, %v602
        %v605 = vshrl.u32 %v446, 16
        %v607 = vshll.u32 %v446, 16
        %v609 = vrot.slane %v607, 1
        %v610 = vor.u32 %v605, %v609
        %v612 = vshrl.u32 %v448, 16
        %v614 = vshll.u32 %v448, 16
        %v616 = vrot.slane %v614, 1
        %v617 = vor.u32 %v612, %v616
        %618 = vrot.lane.b32.xlu0 %v568, 32
        %v619 = vpop.permute.xlu0 %618
        %620 = vrot.lane.b32.xlu0 %v575, 32
        %v621 = vpop.permute.xlu0 %620
        %622 = vrot.lane.b32.xlu0 %v582, 32
        %v623 = vpop.permute.xlu0 %622
        %624 = vrot.lane.b32.xlu0 %v589, 32
        %v625 = vpop.permute.xlu0 %624
        %626 = vrot.lane.b32.xlu0 %v596, 32
        %v627 = vpop.permute.xlu0 %626
        %628 = vrot.lane.b32.xlu0 %v603, 32
        %v629 = vpop.permute.xlu0 %628
        %630 = vrot.lane.b32.xlu0 %v610, 32
        %v631 = vpop.permute.xlu0 %630
        %632 = vrot.lane.b32.xlu0 %v617, 32
        %v633 = vpop.permute.xlu0 %632
        %634 = vrot.lane.b32.xlu0 %v568, 40
        %v635 = vpop.permute.xlu0 %634
        %636 = vrot.lane.b32.xlu0 %v575, 40
        %v637 = vpop.permute.xlu0 %636
        %638 = vrot.lane.b32.xlu0 %v582, 40
        %v639 = vpop.permute.xlu0 %638
        %640 = vrot.lane.b32.xlu0 %v589, 40
        %v641 = vpop.permute.xlu0 %640
        %642 = vrot.lane.b32.xlu0 %v596, 40
        %v643 = vpop.permute.xlu0 %642
        %644 = vrot.lane.b32.xlu0 %v603, 40
        %v645 = vpop.permute.xlu0 %644
        %646 = vrot.lane.b32.xlu0 %v610, 40
        %v647 = vpop.permute.xlu0 %646
        %648 = vrot.lane.b32.xlu0 %v617, 40
        %v649 = vpop.permute.xlu0 %648
        %658 = vrot.lane.b32.xlu0 %v435, 48
        %v659 = vpop.permute.xlu0 %658
        %660 = vrot.lane.b32.xlu0 %v437, 48
        %v661 = vpop.permute.xlu0 %660
        %662 = vrot.lane.b32.xlu0 %v439, 48
        %v663 = vpop.permute.xlu0 %662
        %664 = vrot.lane.b32.xlu0 %v441, 48
        %v665 = vpop.permute.xlu0 %664
        %666 = vrot.lane.b32.xlu0 %v443, 48
        %v667 = vpop.permute.xlu0 %666
        %668 = vrot.lane.b32.xlu0 %v445, 48
        %v669 = vpop.permute.xlu0 %668
        %670 = vrot.lane.b32.xlu0 %v447, 48
        %v671 = vpop.permute.xlu0 %670
        %672 = vrot.lane.b32.xlu0 %v449, 48
        %v673 = vpop.permute.xlu0 %672
        %v675 = vshrl.u32 %v449, 16
        %v677 = vshll.u32 %v449, 16
        %v679 = vrot.slane %v677, 1
        %v680 = vor.u32 %v675, %v679
        %681 = vrot.lane.b32.xlu0 %v463, 56
        %v682 = vpop.permute.xlu0 %681
        %683 = vrot.lane.b32.xlu0 %v470, 56
        %v684 = vpop.permute.xlu0 %683
        %685 = vrot.lane.b32.xlu0 %v477, 56
        %v686 = vpop.permute.xlu0 %685
        %687 = vrot.lane.b32.xlu0 %v484, 56
        %v688 = vpop.permute.xlu0 %687
        %689 = vrot.lane.b32.xlu0 %v491, 56
        %v690 = vpop.permute.xlu0 %689
        %691 = vrot.lane.b32.xlu0 %v498, 56
        %v692 = vpop.permute.xlu0 %691
        %693 = vrot.lane.b32.xlu0 %v505, 56
        %v694 = vpop.permute.xlu0 %693
        %695 = vrot.lane.b32.xlu0 %v680, 56
        %v696 = vpop.permute.xlu0 %695
        %697 = vrot.lane.b32.xlu0 %v463, 64
        %v698 = vpop.permute.xlu0 %697
        %699 = vrot.lane.b32.xlu0 %v470, 64
        %v700 = vpop.permute.xlu0 %699
        %701 = vrot.lane.b32.xlu0 %v477, 64
        %v702 = vpop.permute.xlu0 %701
        %703 = vrot.lane.b32.xlu0 %v484, 64
        %v704 = vpop.permute.xlu0 %703
        %705 = vrot.lane.b32.xlu0 %v491, 64
        %v706 = vpop.permute.xlu0 %705
        %707 = vrot.lane.b32.xlu0 %v498, 64
        %v708 = vpop.permute.xlu0 %707
        %709 = vrot.lane.b32.xlu0 %v505, 64
        %v710 = vpop.permute.xlu0 %709
        %711 = vrot.lane.b32.xlu0 %v680, 64
        %v712 = vpop.permute.xlu0 %711
        %vm713 = vcmask 64512
        %v715 = vsel %vm713, %v433, %v507
        %v717 = vsel %vm713, %v435, %v509
        %v719 = vsel %vm713, %v437, %v511
        %v721 = vsel %vm713, %v439, %v513
        %v723 = vsel %vm713, %v441, %v515
        %v725 = vsel %vm713, %v443, %v517
        %v727 = vsel %vm713, %v445, %v519
        %v729 = vsel %vm713, %v447, %v521
        %vm730 = vcmask 130048
        %v732 = vsel %vm730, %v715, %v523
        %v734 = vsel %vm730, %v717, %v525
        %v736 = vsel %vm730, %v719, %v527
        %v738 = vsel %vm730, %v721, %v529
        %v740 = vsel %vm730, %v723, %v531
        %v742 = vsel %vm730, %v725, %v533
        %v744 = vsel %vm730, %v727, %v535
        %v746 = vsel %vm730, %v729, %v537
        %vm747 = vcmask 195584
        %v749 = vsel %vm747, %v732, %v547
        %v751 = vsel %vm747, %v734, %v549
        %v753 = vsel %vm747, %v736, %v551
        %v755 = vsel %vm747, %v738, %v553
        %v757 = vsel %vm747, %v740, %v555
        %v759 = vsel %vm747, %v742, %v557
        %v761 = vsel %vm747, %v744, %v559
        %v763 = vsel %vm747, %v746, %v561
        %vm764 = vcmask 261120
        %v766 = vsel %vm764, %v749, %v619
        %v768 = vsel %vm764, %v751, %v621
        %v770 = vsel %vm764, %v753, %v623
        %v772 = vsel %vm764, %v755, %v625
        %v774 = vsel %vm764, %v757, %v627
        %v776 = vsel %vm764, %v759, %v629
        %v778 = vsel %vm764, %v761, %v631
        %v780 = vsel %vm764, %v763, %v633
        %vm781 = vcmask 326656
        %v783 = vsel %vm781, %v766, %v635
        %v785 = vsel %vm781, %v768, %v637
        %v787 = vsel %vm781, %v770, %v639
        %v789 = vsel %vm781, %v772, %v641
        %v791 = vsel %vm781, %v774, %v643
        %v793 = vsel %vm781, %v776, %v645
        %v795 = vsel %vm781, %v778, %v647
        %v797 = vsel %vm781, %v780, %v649
        %vm798 = vcmask 392192
        %v800 = vsel %vm798, %v783, %v659
        %v802 = vsel %vm798, %v785, %v661
        %v804 = vsel %vm798, %v787, %v663
        %v806 = vsel %vm798, %v789, %v665
        %v808 = vsel %vm798, %v791, %v667
        %v810 = vsel %vm798, %v793, %v669
        %v812 = vsel %vm798, %v795, %v671
        %v814 = vsel %vm798, %v797, %v673
        %vm815 = vcmask 457728
        %v817 = vsel %vm815, %v800, %v682
        %v819 = vsel %vm815, %v802, %v684
        %v821 = vsel %vm815, %v804, %v686
        %v823 = vsel %vm815, %v806, %v688
        %v825 = vsel %vm815, %v808, %v690
        %v827 = vsel %vm815, %v810, %v692
        %v829 = vsel %vm815, %v812, %v694
        %v831 = vsel %vm815, %v814, %v696
        %vm832 = vcmask 523264
        %v834 = vsel %vm832, %v817, %v698
        %v836 = vsel %vm832, %v819, %v700
        %v838 = vsel %vm832, %v821, %v702
        %v840 = vsel %vm832, %v823, %v704
        %v842 = vsel %vm832, %v825, %v706
        %v844 = vsel %vm832, %v827, %v708
        %v846 = vsel %vm832, %v829, %v710
        %v848 = vsel %vm832, %v831, %v712
        %v849 = vld [vmem:[%s1] sm:$0xf]
        %v850 = vld [vmem:[%s1 + $0x4] sm:$0xf]
        %v851 = vld [vmem:[%s1 + $0x8] sm:$0xf]
        %v852 = vld [vmem:[%s1 + $0xc] sm:$0xf]
        %v853 = vld [vmem:[%s1 + $0x10] sm:$0xf]
        %v854 = vld [vmem:[%s1 + $0x14] sm:$0xf]
        %v855 = vld [vmem:[%s1 + $0x18] sm:$0xf]
        %v856 = vld [vmem:[%s1 + $0x1c] sm:$0xf]
        %v857 = vld [vmem:[%s1 + $0x20] sm:$0xf]
        %v858 = vld [vmem:[%s3] sm:$0x1]
        %v859 = vlaneseq
        %v860 = vshrl.u32 %v859, 7
        %v861 = vsub.s32 0, %v860
        %v862 = vrot.slane %v858, %v861
        %v871 = vunpack.c.l.b16 %v834
        %v872 = vunpack.c.l.b16 %v836
        %v873 = vunpack.c.l.b16 %v838
        %v874 = vunpack.c.l.b16 %v840
        %v875 = vunpack.c.l.b16 %v842
        %v876 = vunpack.c.l.b16 %v844
        %v877 = vunpack.c.l.b16 %v846
        %v878 = vunpack.c.l.b16 %v848
        %v879 = vpack.c.b16 %v872, %v871
        %v880 = vpack.c.b16 %v874, %v873
        %v881 = vpack.c.b16 %v876, %v875
        %v882 = vpack.c.b16 %v878, %v877
        %v892 = vunpack.c.l.b16 %v849
        %v893 = vunpack.c.l.b16 %v850
        %v894 = vunpack.c.l.b16 %v851
        %v895 = vunpack.c.l.b16 %v852
        %v896 = vunpack.c.l.b16 %v853
        %v897 = vunpack.c.l.b16 %v854
        %v898 = vunpack.c.l.b16 %v855
        %v899 = vunpack.c.l.b16 %v856
        %v900 = vunpack.c.l.b16 %v857
        %v901 = vpack.c.b16 %v893, %v892
        %v902 = vpack.c.b16 %v895, %v894
        %v903 = vpack.c.b16 %v897, %v896
        %v904 = vpack.c.b16 %v899, %v898
        %v905 = vpack.c.b16 %v900, %v900
        %vm910 = vcmask 588800
        %v912 = vsel %vm910, %v879, 0
        %v915 = vsel %vm910, %v880, 0
        %v918 = vsel %vm910, %v881, 0
        %v921 = vsel %vm910, %v882, 0
        %vm923 = vcmask 1043456
        %v925 = vsel %vm923, %v905, 0
        %927 = vmatprep.subr.bf16.mxu0 0
        %928 = vmatpush1.bf16.msra.mxu0 %v901
        %929 = vmatprep.subr.bf16.mxu0 0
        %930 = vmatpush1.bf16.msra.mxu0 %v902
        %931 = vmatprep.subr.bf16.mxu0 0
        %932 = vmatpush1.bf16.msra.mxu0 %v903
        %933 = vmatprep.subr.bf16.mxu0 0
        %934 = vmatpush1.bf16.msra.mxu0 %v904
        %935 = vmatprep.subr.bf16.mxu0 0
        %936 = vmatpush1.bf16.msra.mxu0 %v925
        %937 = vmatprep.subr.bf16.mxu0 0
        %938 = vmatpush1.bf16.msra.mxu0 0
        %939 = vmatprep.subr.bf16.mxu0 0
        %940 = vmatpush1.bf16.msra.mxu0 0
        %941 = vmatprep.subr.bf16.mxu0 0
        %942 = vmatpush1.bf16.msra.mxu0 0
        %943 = vmatprep.subr.bf16.mxu0 0
        %944 = vmatpush1.bf16.msra.mxu0 0
        %945 = vmatprep.subr.bf16.mxu0 0
        %946 = vmatpush1.bf16.msra.mxu0 0
        %947 = vmatprep.subr.bf16.mxu0 0
        %948 = vmatpush1.bf16.msra.mxu0 0
        %949 = vmatprep.subr.bf16.mxu0 0
        %950 = vmatpush1.bf16.msra.mxu0 0
        %951 = vmatprep.subr.bf16.mxu0 0
        %952 = vmatpush1.bf16.msra.mxu0 0
        %953 = vmatprep.subr.bf16.mxu0 0
        %954 = vmatpush1.bf16.msra.mxu0 0
        %955 = vmatprep.subr.bf16.mxu0 0
        %956 = vmatpush1.bf16.msra.mxu0 0
        %957 = vmatprep.subr.bf16.mxu0 0
        %958 = vmatpush1.bf16.msra.mxu0 0
        %959 = vmatprep.mubr.bf16.mxu0 0
        %960 = vmatmul.mubr.bf16.gmra.mrb[0].mxu0 %v912
        %v961 = vpop.f32.mrb[0].mxu0
        %v962 = vadd.f32 %v862, %v961
        %v963 = vpop.f32.mrb[0].mxu0
        %v964 = vpop.f32.mrb[0].mxu0
        %v965 = vadd.f32 %v862, %v964
        %v966 = vpop.f32.mrb[0].mxu0
        %967 = vmatprep.mubr.bf16.mxu0 0
        %968 = vmatmul.mubr.bf16.gmra.mrb[0].mxu0 %v915
        %v969 = vpop.f32.mrb[0].mxu0
        %v970 = vadd.f32 %v862, %v969
        %v971 = vpop.f32.mrb[0].mxu0
        %v972 = vpop.f32.mrb[0].mxu0
        %v973 = vadd.f32 %v862, %v972
        %v974 = vpop.f32.mrb[0].mxu0
        %975 = vmatprep.mubr.bf16.mxu0 0
        %976 = vmatmul.mubr.bf16.gmra.mrb[0].mxu0 %v918
        %v977 = vpop.f32.mrb[0].mxu0
        %v978 = vadd.f32 %v862, %v977
        %v979 = vpop.f32.mrb[0].mxu0
        %v980 = vpop.f32.mrb[0].mxu0
        %v981 = vadd.f32 %v862, %v980
        %v982 = vpop.f32.mrb[0].mxu0
        %983 = vmatprep.mubr.bf16.mxu0 0
        %984 = vmatmul.mubr.bf16.gmra.mrb[0].mxu0 %v921
        %v985 = vpop.f32.mrb[0].mxu0
        %v986 = vadd.f32 %v862, %v985
        %v987 = vpop.f32.mrb[0].mxu0
        %v988 = vpop.f32.mrb[0].mxu0
        %v989 = vadd.f32 %v862, %v988
        %v990 = vpop.f32.mrb[0].mxu0
        %991 = vdwg.mxu0
        %v992 = vmax.f32 %v962, 0.0
        %v993 = vmax.f32 %v965, 0.0
        %v994 = vmax.f32 %v970, 0.0
        %v995 = vmax.f32 %v973, 0.0
        %v996 = vmax.f32 %v978, 0.0
        %v997 = vmax.f32 %v981, 0.0
        %v998 = vmax.f32 %v986, 0.0
        %v999 = vmax.f32 %v989, 0.0
        %v1000 = vpack.c.bf16 %v993, %v992
        %v1001 = vpack.c.bf16 %v995, %v994
        %v1002 = vpack.c.bf16 %v997, %v996
        %v1003 = vpack.c.bf16 %v999, %v998
        %v1008 = vunpack.c.l.b16 %v1000
        %v1009 = vunpack.c.h.b16 %v1000
        %v1010 = vunpack.c.l.b16 %v1001
        %v1011 = vunpack.c.h.b16 %v1001
        %v1012 = vunpack.c.l.b16 %v1002
        %v1013 = vunpack.c.h.b16 %v1002
        %v1014 = vunpack.c.l.b16 %v1003
        %v1015 = vunpack.c.h.b16 %v1003
        %v1016 = vpack.c.b16 %v1008, %v1008
        %v1017 = vpack.c.b16 %v1009, %v1009
        %v1018 = vpack.c.b16 %v1010, %v1010
        %v1019 = vpack.c.b16 %v1011, %v1011
        %v1020 = vpack.c.b16 %v1012, %v1012
        %v1021 = vpack.c.b16 %v1013, %v1013
        %v1022 = vpack.c.b16 %v1014, %v1014
        %v1023 = vpack.c.b16 %v1015, %v1015
        %v1025 = vshrl.u32 %v1016, 16
        %v1027 = vrot.slane %v1025, 7
        %v1028 = vshll.u32 %v1016, 16
        %v1030 = vor.u32 %v1027, %v1028
        %v1032 = vshrl.u32 %v1017, 16
        %v1034 = vrot.slane %v1032, 7
        %v1035 = vshll.u32 %v1017, 16
        %v1037 = vor.u32 %v1034, %v1035
        %v1039 = vshrl.u32 %v1018, 16
        %v1041 = vrot.slane %v1039, 7
        %v1042 = vshll.u32 %v1018, 16
        %v1044 = vor.u32 %v1041, %v1042
        %v1046 = vshrl.u32 %v1019, 16
        %v1048 = vrot.slane %v1046, 7
        %v1049 = vshll.u32 %v1019, 16
        %v1051 = vor.u32 %v1048, %v1049
        %v1053 = vshrl.u32 %v1020, 16
        %v1055 = vrot.slane %v1053, 7
        %v1056 = vshll.u32 %v1020, 16
        %v1058 = vor.u32 %v1055, %v1056
        %v1060 = vshrl.u32 %v1021, 16
        %v1062 = vrot.slane %v1060, 7
        %v1063 = vshll.u32 %v1021, 16
        %v1065 = vor.u32 %v1062, %v1063
        %v1067 = vshrl.u32 %v1022, 16
        %v1069 = vrot.slane %v1067, 7
        %v1070 = vshll.u32 %v1022, 16
        %v1072 = vor.u32 %v1069, %v1070
        %v1074 = vshrl.u32 %v1023, 16
        %v1076 = vrot.slane %v1074, 7
        %v1077 = vshll.u32 %v1023, 16
        %v1079 = vor.u32 %v1076, %v1077
        %v1088 = vsel %vm432, 0, %v1030
        %v1089 = vsel %vm432, 0, %v1037
        %v1090 = vsel %vm432, 0, %v1044
        %v1091 = vsel %vm432, 0, %v1051
        %v1092 = vsel %vm432, 0, %v1058
        %v1093 = vsel %vm432, 0, %v1065
        %v1094 = vsel %vm432, 0, %v1072
        %v1095 = vsel %vm432, 0, %v1079
        %vm1096 = vcmask 1044480
        %vm1097 = vsmask.f32 4352
        %vm1098 = vmand %vm1096, %vm1097
        %v1099 = vsel %vm1098, %v433, 0
        %v1100 = vsel %vm1098, %v1088, 0
        %v1101 = vsel %vm1098, %v1089, 0
        %v1102 = vsel %vm1098, %v1090, 0
        %v1103 = vsel %vm1098, %v1091, 0
        %v1104 = vsel %vm1098, %v1092, 0
        %v1105 = vsel %vm1098, %v1093, 0
        %v1106 = vsel %vm1098, %v1094, 0
        %v1107 = vsel %vm1098, %v1095, 0
        %v1109 = vshrl.u32 %v1099, 16
        %v1111 = vshll.u32 %v1099, 16
        %v1113 = vrot.slane %v1111, 1
        %v1114 = vor.u32 %v1109, %v1113
        %v1116 = vshrl.u32 %v1100, 16
        %v1118 = vshll.u32 %v1100, 16
        %v1120 = vrot.slane %v1118, 1
        %v1121 = vor.u32 %v1116, %v1120
        %v1123 = vshrl.u32 %v1101, 16
        %v1125 = vshll.u32 %v1101, 16
        %v1127 = vrot.slane %v1125, 1
        %v1128 = vor.u32 %v1123, %v1127
        %v1130 = vshrl.u32 %v1102, 16
        %v1132 = vshll.u32 %v1102, 16
        %v1134 = vrot.slane %v1132, 1
        %v1135 = vor.u32 %v1130, %v1134
        %v1137 = vshrl.u32 %v1103, 16
        %v1139 = vshll.u32 %v1103, 16
        %v1141 = vrot.slane %v1139, 1
        %v1142 = vor.u32 %v1137, %v1141
        %v1144 = vshrl.u32 %v1104, 16
        %v1146 = vshll.u32 %v1104, 16
        %v1148 = vrot.slane %v1146, 1
        %v1149 = vor.u32 %v1144, %v1148
        %v1151 = vshrl.u32 %v1105, 16
        %v1153 = vshll.u32 %v1105, 16
        %v1155 = vrot.slane %v1153, 1
        %v1156 = vor.u32 %v1151, %v1155
        %v1158 = vshrl.u32 %v1106, 16
        %v1160 = vshll.u32 %v1106, 16
        %v1162 = vrot.slane %v1160, 1
        %v1163 = vor.u32 %v1158, %v1162
        %1164 = vrot.lane.b32.xlu0 %v1114, 8
        %v1165 = vpop.permute.xlu0 %1164
        %1166 = vrot.lane.b32.xlu0 %v1121, 8
        %v1167 = vpop.permute.xlu0 %1166
        %1168 = vrot.lane.b32.xlu0 %v1128, 8
        %v1169 = vpop.permute.xlu0 %1168
        %1170 = vrot.lane.b32.xlu0 %v1135, 8
        %v1171 = vpop.permute.xlu0 %1170
        %1172 = vrot.lane.b32.xlu0 %v1142, 8
        %v1173 = vpop.permute.xlu0 %1172
        %1174 = vrot.lane.b32.xlu0 %v1149, 8
        %v1175 = vpop.permute.xlu0 %1174
        %1176 = vrot.lane.b32.xlu0 %v1156, 8
        %v1177 = vpop.permute.xlu0 %1176
        %1178 = vrot.lane.b32.xlu0 %v1163, 8
        %v1179 = vpop.permute.xlu0 %1178
        %v1188 = vrot.slane %v1099, 1
        %v1189 = vrot.slane %v1100, 1
        %v1190 = vrot.slane %v1101, 1
        %v1191 = vrot.slane %v1102, 1
        %v1192 = vrot.slane %v1103, 1
        %v1193 = vrot.slane %v1104, 1
        %v1194 = vrot.slane %v1105, 1
        %v1195 = vrot.slane %v1106, 1
        %1196 = vrot.lane.b32.xlu0 %v1188, 16
        %v1197 = vpop.permute.xlu0 %1196
        %1198 = vrot.lane.b32.xlu0 %v1189, 16
        %v1199 = vpop.permute.xlu0 %1198
        %1200 = vrot.lane.b32.xlu0 %v1190, 16
        %v1201 = vpop.permute.xlu0 %1200
        %1202 = vrot.lane.b32.xlu0 %v1191, 16
        %v1203 = vpop.permute.xlu0 %1202
        %1204 = vrot.lane.b32.xlu0 %v1192, 16
        %v1205 = vpop.permute.xlu0 %1204
        %1206 = vrot.lane.b32.xlu0 %v1193, 16
        %v1207 = vpop.permute.xlu0 %1206
        %1208 = vrot.lane.b32.xlu0 %v1194, 16
        %v1209 = vpop.permute.xlu0 %1208
        %1210 = vrot.lane.b32.xlu0 %v1195, 16
        %v1211 = vpop.permute.xlu0 %1210
        %1213 = vrot.lane.b32.xlu0 %v1100, 24
        %v1214 = vpop.permute.xlu0 %1213
        %1215 = vrot.lane.b32.xlu0 %v1101, 24
        %v1216 = vpop.permute.xlu0 %1215
        %1217 = vrot.lane.b32.xlu0 %v1102, 24
        %v1218 = vpop.permute.xlu0 %1217
        %1219 = vrot.lane.b32.xlu0 %v1103, 24
        %v1220 = vpop.permute.xlu0 %1219
        %1221 = vrot.lane.b32.xlu0 %v1104, 24
        %v1222 = vpop.permute.xlu0 %1221
        %1223 = vrot.lane.b32.xlu0 %v1105, 24
        %v1224 = vpop.permute.xlu0 %1223
        %1225 = vrot.lane.b32.xlu0 %v1106, 24
        %v1226 = vpop.permute.xlu0 %1225
        %1227 = vrot.lane.b32.xlu0 %v1107, 24
        %v1228 = vpop.permute.xlu0 %1227
        %v1230 = vshrl.u32 %v1107, 16
        %v1232 = vshll.u32 %v1107, 16
        %v1234 = vrot.slane %v1232, 1
        %v1235 = vor.u32 %v1230, %v1234
        %1236 = vrot.lane.b32.xlu0 %v1121, 32
        %v1237 = vpop.permute.xlu0 %1236
        %1238 = vrot.lane.b32.xlu0 %v1128, 32
        %v1239 = vpop.permute.xlu0 %1238
        %1240 = vrot.lane.b32.xlu0 %v1135, 32
        %v1241 = vpop.permute.xlu0 %1240
        %1242 = vrot.lane.b32.xlu0 %v1142, 32
        %v1243 = vpop.permute.xlu0 %1242
        %1244 = vrot.lane.b32.xlu0 %v1149, 32
        %v1245 = vpop.permute.xlu0 %1244
        %1246 = vrot.lane.b32.xlu0 %v1156, 32
        %v1247 = vpop.permute.xlu0 %1246
        %1248 = vrot.lane.b32.xlu0 %v1163, 32
        %v1249 = vpop.permute.xlu0 %1248
        %1250 = vrot.lane.b32.xlu0 %v1235, 32
        %v1251 = vpop.permute.xlu0 %1250
        %v1252 = vrot.slane %v1107, 1
        %1253 = vrot.lane.b32.xlu0 %v1189, 40
        %v1254 = vpop.permute.xlu0 %1253
        %1255 = vrot.lane.b32.xlu0 %v1190, 40
        %v1256 = vpop.permute.xlu0 %1255
        %1257 = vrot.lane.b32.xlu0 %v1191, 40
        %v1258 = vpop.permute.xlu0 %1257
        %1259 = vrot.lane.b32.xlu0 %v1192, 40
        %v1260 = vpop.permute.xlu0 %1259
        %1261 = vrot.lane.b32.xlu0 %v1193, 40
        %v1262 = vpop.permute.xlu0 %1261
        %1263 = vrot.lane.b32.xlu0 %v1194, 40
        %v1264 = vpop.permute.xlu0 %1263
        %1265 = vrot.lane.b32.xlu0 %v1195, 40
        %v1266 = vpop.permute.xlu0 %1265
        %1267 = vrot.lane.b32.xlu0 %v1252, 40
        %v1268 = vpop.permute.xlu0 %1267
        %1269 = vrot.lane.b32.xlu0 %v1101, 48
        %v1270 = vpop.permute.xlu0 %1269
        %1271 = vrot.lane.b32.xlu0 %v1102, 48
        %v1272 = vpop.permute.xlu0 %1271
        %1273 = vrot.lane.b32.xlu0 %v1103, 48
        %v1274 = vpop.permute.xlu0 %1273
        %1275 = vrot.lane.b32.xlu0 %v1104, 48
        %v1276 = vpop.permute.xlu0 %1275
        %1277 = vrot.lane.b32.xlu0 %v1105, 48
        %v1278 = vpop.permute.xlu0 %1277
        %1279 = vrot.lane.b32.xlu0 %v1106, 48
        %v1280 = vpop.permute.xlu0 %1279
        %1281 = vrot.lane.b32.xlu0 %v1107, 48
        %v1282 = vpop.permute.xlu0 %1281
        %1283 = vrot.lane.b32.xlu0 %v1099, 48
        %v1284 = vpop.permute.xlu0 %1283
        %1285 = vrot.lane.b32.xlu0 %v1128, 56
        %v1286 = vpop.permute.xlu0 %1285
        %1287 = vrot.lane.b32.xlu0 %v1135, 56
        %v1288 = vpop.permute.xlu0 %1287
        %1289 = vrot.lane.b32.xlu0 %v1142, 56
        %v1290 = vpop.permute.xlu0 %1289
        %1291 = vrot.lane.b32.xlu0 %v1149, 56
        %v1292 = vpop.permute.xlu0 %1291
        %1293 = vrot.lane.b32.xlu0 %v1156, 56
        %v1294 = vpop.permute.xlu0 %1293
        %1295 = vrot.lane.b32.xlu0 %v1163, 56
        %v1296 = vpop.permute.xlu0 %1295
        %1297 = vrot.lane.b32.xlu0 %v1235, 56
        %v1298 = vpop.permute.xlu0 %1297
        %1299 = vrot.lane.b32.xlu0 %v1114, 56
        %v1300 = vpop.permute.xlu0 %1299
        %1301 = vrot.lane.b32.xlu0 %v1190, 64
        %v1302 = vpop.permute.xlu0 %1301
        %1303 = vrot.lane.b32.xlu0 %v1191, 64
        %v1304 = vpop.permute.xlu0 %1303
        %1305 = vrot.lane.b32.xlu0 %v1192, 64
        %v1306 = vpop.permute.xlu0 %1305
        %1307 = vrot.lane.b32.xlu0 %v1193, 64
        %v1308 = vpop.permute.xlu0 %1307
        %1309 = vrot.lane.b32.xlu0 %v1194, 64
        %v1310 = vpop.permute.xlu0 %1309
        %1311 = vrot.lane.b32.xlu0 %v1195, 64
        %v1312 = vpop.permute.xlu0 %1311
        %1313 = vrot.lane.b32.xlu0 %v1252, 64
        %v1314 = vpop.permute.xlu0 %1313
        %1315 = vrot.lane.b32.xlu0 %v1188, 64
        %v1316 = vpop.permute.xlu0 %1315
        %v1325 = vunpack.c.l.b16 %v278
        %v1326 = vunpack.c.l.b16 %v280
        %v1327 = vunpack.c.l.b16 %v282
        %v1328 = vunpack.c.l.b16 %v284
        %v1329 = vunpack.c.l.b16 %v286
        %v1330 = vunpack.c.l.b16 %v288
        %v1331 = vunpack.c.l.b16 %v290
        %v1332 = vunpack.c.l.b16 %v292
        %v1333 = vpack.c.b16 %v1325, %v1325
        %v1334 = vpack.c.b16 %v1326, %v1326
        %v1335 = vpack.c.b16 %v1327, %v1327
        %v1336 = vpack.c.b16 %v1328, %v1328
        %v1337 = vpack.c.b16 %v1329, %v1329
        %v1338 = vpack.c.b16 %v1330, %v1330
        %v1339 = vpack.c.b16 %v1331, %v1331
        %v1340 = vpack.c.b16 %v1332, %v1332
        %1341 = vrot.lane.b32.xlu0 %v1333, 72
        %v1342 = vpop.permute.xlu0 %1341
        %1343 = vrot.lane.b32.xlu0 %v1334, 72
        %v1344 = vpop.permute.xlu0 %1343
        %1345 = vrot.lane.b32.xlu0 %v1335, 72
        %v1346 = vpop.permute.xlu0 %1345
        %1347 = vrot.lane.b32.xlu0 %v1336, 72
        %v1348 = vpop.permute.xlu0 %1347
        %1349 = vrot.lane.b32.xlu0 %v1337, 72
        %v1350 = vpop.permute.xlu0 %1349
        %1351 = vrot.lane.b32.xlu0 %v1338, 72
        %v1352 = vpop.permute.xlu0 %1351
        %1353 = vrot.lane.b32.xlu0 %v1339, 72
        %v1354 = vpop.permute.xlu0 %1353
        %1355 = vrot.lane.b32.xlu0 %v1340, 72
        %v1356 = vpop.permute.xlu0 %1355
        %v1358 = vsel %vm713, %v1099, %v1165
        %v1360 = vsel %vm713, %v1100, %v1167
        %v1362 = vsel %vm713, %v1101, %v1169
        %v1364 = vsel %vm713, %v1102, %v1171
        %v1366 = vsel %vm713, %v1103, %v1173
        %v1368 = vsel %vm713, %v1104, %v1175
        %v1370 = vsel %vm713, %v1105, %v1177
        %v1372 = vsel %vm713, %v1106, %v1179
        %v1374 = vsel %vm730, %v1358, %v1197
        %v1376 = vsel %vm730, %v1360, %v1199
        %v1378 = vsel %vm730, %v1362, %v1201
        %v1380 = vsel %vm730, %v1364, %v1203
        %v1382 = vsel %vm730, %v1366, %v1205
        %v1384 = vsel %vm730, %v1368, %v1207
        %v1386 = vsel %vm730, %v1370, %v1209
        %v1388 = vsel %vm730, %v1372, %v1211
        %v1390 = vsel %vm747, %v1374, %v1214
        %v1392 = vsel %vm747, %v1376, %v1216
        %v1394 = vsel %vm747, %v1378, %v1218
        %v1396 = vsel %vm747, %v1380, %v1220
        %v1398 = vsel %vm747, %v1382, %v1222
        %v1400 = vsel %vm747, %v1384, %v1224
        %v1402 = vsel %vm747, %v1386, %v1226
        %v1404 = vsel %vm747, %v1388, %v1228
        %v1406 = vsel %vm764, %v1390, %v1237
        %v1408 = vsel %vm764, %v1392, %v1239
        %v1410 = vsel %vm764, %v1394, %v1241
        %v1412 = vsel %vm764, %v1396, %v1243
        %v1414 = vsel %vm764, %v1398, %v1245
        %v1416 = vsel %vm764, %v1400, %v1247
        %v1418 = vsel %vm764, %v1402, %v1249
        %v1420 = vsel %vm764, %v1404, %v1251
        %v1422 = vsel %vm781, %v1406, %v1254
        %v1424 = vsel %vm781, %v1408, %v1256
        %v1426 = vsel %vm781, %v1410, %v1258
        %v1428 = vsel %vm781, %v1412, %v1260
        %v1430 = vsel %vm781, %v1414, %v1262
        %v1432 = vsel %vm781, %v1416, %v1264
        %v1434 = vsel %vm781, %v1418, %v1266
        %v1436 = vsel %vm781, %v1420, %v1268
        %v1438 = vsel %vm798, %v1422, %v1270
        %v1440 = vsel %vm798, %v1424, %v1272
        %v1442 = vsel %vm798, %v1426, %v1274
        %v1444 = vsel %vm798, %v1428, %v1276
        %v1446 = vsel %vm798, %v1430, %v1278
        %v1448 = vsel %vm798, %v1432, %v1280
        %v1450 = vsel %vm798, %v1434, %v1282
        %v1452 = vsel %vm798, %v1436, %v1284
        %v1454 = vsel %vm815, %v1438, %v1286
        %v1456 = vsel %vm815, %v1440, %v1288
        %v1458 = vsel %vm815, %v1442, %v1290
        %v1460 = vsel %vm815, %v1444, %v1292
        %v1462 = vsel %vm815, %v1446, %v1294
        %v1464 = vsel %vm815, %v1448, %v1296
        %v1466 = vsel %vm815, %v1450, %v1298
        %v1468 = vsel %vm815, %v1452, %v1300
        %v1470 = vsel %vm832, %v1454, %v1302
        %v1472 = vsel %vm832, %v1456, %v1304
        %v1474 = vsel %vm832, %v1458, %v1306
        %v1476 = vsel %vm832, %v1460, %v1308
        %v1478 = vsel %vm832, %v1462, %v1310
        %v1480 = vsel %vm832, %v1464, %v1312
        %v1482 = vsel %vm832, %v1466, %v1314
        %v1484 = vsel %vm832, %v1468, %v1316
        %v1486 = vsel %vm910, %v1470, %v1342
        %v1488 = vsel %vm910, %v1472, %v1344
        %v1490 = vsel %vm910, %v1474, %v1346
        %v1492 = vsel %vm910, %v1476, %v1348
        %v1494 = vsel %vm910, %v1478, %v1350
        %v1496 = vsel %vm910, %v1480, %v1352
        %v1498 = vsel %vm910, %v1482, %v1354
        %v1500 = vsel %vm910, %v1484, %v1356
        %v1501 = vld [vmem:[%s2] sm:$0xf]
        %v1502 = vld [vmem:[%s2 + $0x4] sm:$0xf]
        %v1503 = vld [vmem:[%s2 + $0x8] sm:$0xf]
        %v1504 = vld [vmem:[%s2 + $0xc] sm:$0xf]
        %v1505 = vld [vmem:[%s2 + $0x10] sm:$0xf]
        %v1506 = vld [vmem:[%s2 + $0x14] sm:$0xf]
        %v1507 = vld [vmem:[%s2 + $0x18] sm:$0xf]
        %v1508 = vld [vmem:[%s2 + $0x1c] sm:$0xf]
        %v1509 = vld [vmem:[%s2 + $0x20] sm:$0xf]
        %v1510 = vld [vmem:[%s2 + $0x24] sm:$0xf]
        %v1511 = vld [vmem:[%s3 + $0x1] sm:$0x1]
        %v1512 = vlaneseq
        %v1513 = vshrl.u32 %v1512, 7
        %v1514 = vsub.s32 0, %v1513
        %v1515 = vrot.slane %v1511, %v1514
        %v1524 = vunpack.c.l.b16 %v1486
        %v1525 = vunpack.c.l.b16 %v1488
        %v1526 = vunpack.c.l.b16 %v1490
        %v1527 = vunpack.c.l.b16 %v1492
        %v1528 = vunpack.c.l.b16 %v1494
        %v1529 = vunpack.c.l.b16 %v1496
        %v1530 = vunpack.c.l.b16 %v1498
        %v1531 = vunpack.c.l.b16 %v1500
        %v1532 = vpack.c.b16 %v1525, %v1524
        %v1533 = vpack.c.b16 %v1527, %v1526
        %v1534 = vpack.c.b16 %v1529, %v1528
        %v1535 = vpack.c.b16 %v1531, %v1530
        %v1546 = vunpack.c.l.b16 %v1501
        %v1547 = vunpack.c.l.b16 %v1502
        %v1548 = vunpack.c.l.b16 %v1503
        %v1549 = vunpack.c.l.b16 %v1504
        %v1550 = vunpack.c.l.b16 %v1505
        %v1551 = vunpack.c.l.b16 %v1506
        %v1552 = vunpack.c.l.b16 %v1507
        %v1553 = vunpack.c.l.b16 %v1508
        %v1554 = vunpack.c.l.b16 %v1509
        %v1555 = vunpack.c.l.b16 %v1510
        %v1556 = vpack.c.b16 %v1547, %v1546
        %v1557 = vpack.c.b16 %v1549, %v1548
        %v1558 = vpack.c.b16 %v1551, %v1550
        %v1559 = vpack.c.b16 %v1553, %v1552
        %v1560 = vpack.c.b16 %v1555, %v1554
        %vm1566 = vcmask 654336
        %v1568 = vsel %vm1566, %v1532, 0
        %v1571 = vsel %vm1566, %v1533, 0
        %v1574 = vsel %vm1566, %v1534, 0
        %v1577 = vsel %vm1566, %v1535, 0
        %1579 = vmatprep.subr.bf16.mxu0 0
        %1580 = vmatpush1.bf16.msra.mxu0 %v1556
        %1581 = vmatprep.subr.bf16.mxu0 0
        %1582 = vmatpush1.bf16.msra.mxu0 %v1557
        %1583 = vmatprep.subr.bf16.mxu0 0
        %1584 = vmatpush1.bf16.msra.mxu0 %v1558
        %1585 = vmatprep.subr.bf16.mxu0 0
        %1586 = vmatpush1.bf16.msra.mxu0 %v1559
        %1587 = vmatprep.subr.bf16.mxu0 0
        %1588 = vmatpush1.bf16.msra.mxu0 %v1560
        %1589 = vmatprep.subr.bf16.mxu0 0
        %1590 = vmatpush1.bf16.msra.mxu0 0
        %1591 = vmatprep.subr.bf16.mxu0 0
        %1592 = vmatpush1.bf16.msra.mxu0 0
        %1593 = vmatprep.subr.bf16.mxu0 0
        %1594 = vmatpush1.bf16.msra.mxu0 0
        %1595 = vmatprep.subr.bf16.mxu0 0
        %1596 = vmatpush1.bf16.msra.mxu0 0
        %1597 = vmatprep.subr.bf16.mxu0 0
        %1598 = vmatpush1.bf16.msra.mxu0 0
        %1599 = vmatprep.subr.bf16.mxu0 0
        %1600 = vmatpush1.bf16.msra.mxu0 0
        %1601 = vmatprep.subr.bf16.mxu0 0
        %1602 = vmatpush1.bf16.msra.mxu0 0
        %1603 = vmatprep.subr.bf16.mxu0 0
        %1604 = vmatpush1.bf16.msra.mxu0 0
        %1605 = vmatprep.subr.bf16.mxu0 0
        %1606 = vmatpush1.bf16.msra.mxu0 0
        %1607 = vmatprep.subr.bf16.mxu0 0
        %1608 = vmatpush1.bf16.msra.mxu0 0
        %1609 = vmatprep.subr.bf16.mxu0 0
        %1610 = vmatpush1.bf16.msra.mxu0 0
        %1611 = vmatprep.mubr.bf16.mxu0 0
        %1612 = vmatmul.mubr.bf16.gmra.mrb[0].mxu0 %v1568
        %v1613 = vpop.f32.mrb[0].mxu0
        %v1614 = vadd.f32 %v1515, %v1613
        %v1615 = vpop.f32.mrb[0].mxu0
        %v1616 = vpop.f32.mrb[0].mxu0
        %v1617 = vadd.f32 %v1515, %v1616
        %v1618 = vpop.f32.mrb[0].mxu0
        %1619 = vmatprep.mubr.bf16.mxu0 0
        %1620 = vmatmul.mubr.bf16.gmra.mrb[0].mxu0 %v1571
        %v1621 = vpop.f32.mrb[0].mxu0
        %v1622 = vadd.f32 %v1515, %v1621
        %v1623 = vpop.f32.mrb[0].mxu0
        %v1624 = vpop.f32.mrb[0].mxu0
        %v1625 = vadd.f32 %v1515, %v1624
        %v1626 = vpop.f32.mrb[0].mxu0
        %1627 = vmatprep.mubr.bf16.mxu0 0
        %1628 = vmatmul.mubr.bf16.gmra.mrb[0].mxu0 %v1574
        %v1629 = vpop.f32.mrb[0].mxu0
        %v1630 = vadd.f32 %v1515, %v1629
        %v1631 = vpop.f32.mrb[0].mxu0
        %v1632 = vpop.f32.mrb[0].mxu0
        %v1633 = vadd.f32 %v1515, %v1632
        %v1634 = vpop.f32.mrb[0].mxu0
        %1635 = vmatprep.mubr.bf16.mxu0 0
        %1636 = vmatmul.mubr.bf16.gmra.mrb[0].mxu0 %v1577
        %v1637 = vpop.f32.mrb[0].mxu0
        %v1638 = vadd.f32 %v1515, %v1637
        %v1639 = vpop.f32.mrb[0].mxu0
        %v1640 = vpop.f32.mrb[0].mxu0
        %v1641 = vadd.f32 %v1515, %v1640
        %v1642 = vpop.f32.mrb[0].mxu0
        %1643 = vdwg.mxu0
        %v1644 = vmax.f32 %v1614, 0.0
        %v1645 = vmax.f32 %v1617, 0.0
        %v1646 = vmax.f32 %v1622, 0.0
        %v1647 = vmax.f32 %v1625, 0.0
        %v1648 = vmax.f32 %v1630, 0.0
        %v1649 = vmax.f32 %v1633, 0.0
        %v1650 = vmax.f32 %v1638, 0.0
        %v1651 = vmax.f32 %v1641, 0.0
        %v1652 = vpack.c.bf16 %v1645, %v1644
        %v1653 = vpack.c.bf16 %v1647, %v1646
        %v1654 = vpack.c.bf16 %v1649, %v1648
        %v1655 = vpack.c.bf16 %v1651, %v1650
        %v1660 = vunpack.c.l.b16 %v1652
        %v1661 = vunpack.c.h.b16 %v1652
        %v1662 = vunpack.c.l.b16 %v1653
        %v1663 = vunpack.c.h.b16 %v1653
        %v1664 = vunpack.c.l.b16 %v1654
        %v1665 = vunpack.c.h.b16 %v1654
        %v1666 = vunpack.c.l.b16 %v1655
        %v1667 = vunpack.c.h.b16 %v1655
        %v1668 = vpack.c.b16 %v1660, %v1660
        %v1669 = vpack.c.b16 %v1661, %v1661
        %v1670 = vpack.c.b16 %v1662, %v1662
        %v1671 = vpack.c.b16 %v1663, %v1663
        %v1672 = vpack.c.b16 %v1664, %v1664
        %v1673 = vpack.c.b16 %v1665, %v1665
        %v1674 = vpack.c.b16 %v1666, %v1666
        %v1675 = vpack.c.b16 %v1667, %v1667
        %v1677 = vshrl.u32 %v1668, 16
        %v1679 = vrot.slane %v1677, 7
        %v1680 = vshll.u32 %v1668, 16
        %v1682 = vor.u32 %v1679, %v1680
        %v1684 = vshrl.u32 %v1669, 16
        %v1686 = vrot.slane %v1684, 7
        %v1687 = vshll.u32 %v1669, 16
        %v1689 = vor.u32 %v1686, %v1687
        %v1691 = vshrl.u32 %v1670, 16
        %v1693 = vrot.slane %v1691, 7
        %v1694 = vshll.u32 %v1670, 16
        %v1696 = vor.u32 %v1693, %v1694
        %v1698 = vshrl.u32 %v1671, 16
        %v1700 = vrot.slane %v1698, 7
        %v1701 = vshll.u32 %v1671, 16
        %v1703 = vor.u32 %v1700, %v1701
        %v1705 = vshrl.u32 %v1672, 16
        %v1707 = vrot.slane %v1705, 7
        %v1708 = vshll.u32 %v1672, 16
        %v1710 = vor.u32 %v1707, %v1708
        %v1712 = vshrl.u32 %v1673, 16
        %v1714 = vrot.slane %v1712, 7
        %v1715 = vshll.u32 %v1673, 16
        %v1717 = vor.u32 %v1714, %v1715
        %v1719 = vshrl.u32 %v1674, 16
        %v1721 = vrot.slane %v1719, 7
        %v1722 = vshll.u32 %v1674, 16
        %v1724 = vor.u32 %v1721, %v1722
        %v1726 = vshrl.u32 %v1675, 16
        %v1728 = vrot.slane %v1726, 7
        %v1729 = vshll.u32 %v1675, 16
        %v1731 = vor.u32 %v1728, %v1729
        %v1740 = vsel %vm432, 0, %v1682
        %v1741 = vsel %vm432, 0, %v1689
        %v1742 = vsel %vm432, 0, %v1696
        %v1743 = vsel %vm432, 0, %v1703
        %v1744 = vsel %vm432, 0, %v1710
        %v1745 = vsel %vm432, 0, %v1717
        %v1746 = vsel %vm432, 0, %v1724
        %v1747 = vsel %vm432, 0, %v1731
        %v1748 = vsel %vm1098, %v1740, 0
        %v1749 = vsel %vm1098, %v1741, 0
        %v1750 = vsel %vm1098, %v1742, 0
        %v1751 = vsel %vm1098, %v1743, 0
        %v1752 = vsel %vm1098, %v1744, 0
        %v1753 = vsel %vm1098, %v1745, 0
        %v1754 = vsel %vm1098, %v1746, 0
        %v1755 = vsel %vm1098, %v1747, 0
        %v1757 = vshrl.u32 %v1748, 16
        %v1759 = vshll.u32 %v1748, 16
        %v1761 = vrot.slane %v1759, 1
        %v1762 = vor.u32 %v1757, %v1761
        %v1764 = vshrl.u32 %v1749, 16
        %v1766 = vshll.u32 %v1749, 16
        %v1768 = vrot.slane %v1766, 1
        %v1769 = vor.u32 %v1764, %v1768
        %v1771 = vshrl.u32 %v1750, 16
        %v1773 = vshll.u32 %v1750, 16
        %v1775 = vrot.slane %v1773, 1
        %v1776 = vor.u32 %v1771, %v1775
        %v1778 = vshrl.u32 %v1751, 16
        %v1780 = vshll.u32 %v1751, 16
        %v1782 = vrot.slane %v1780, 1
        %v1783 = vor.u32 %v1778, %v1782
        %v1785 = vshrl.u32 %v1752, 16
        %v1787 = vshll.u32 %v1752, 16
        %v1789 = vrot.slane %v1787, 1
        %v1790 = vor.u32 %v1785, %v1789
        %v1792 = vshrl.u32 %v1753, 16
        %v1794 = vshll.u32 %v1753, 16
        %v1796 = vrot.slane %v1794, 1
        %v1797 = vor.u32 %v1792, %v1796
        %v1799 = vshrl.u32 %v1754, 16
        %v1801 = vshll.u32 %v1754, 16
        %v1803 = vrot.slane %v1801, 1
        %v1804 = vor.u32 %v1799, %v1803
        %1805 = vrot.lane.b32.xlu0 %v1762, 8
        %v1806 = vpop.permute.xlu0 %1805
        %1807 = vrot.lane.b32.xlu0 %v1769, 8
        %v1808 = vpop.permute.xlu0 %1807
        %1809 = vrot.lane.b32.xlu0 %v1776, 8
        %v1810 = vpop.permute.xlu0 %1809
        %1811 = vrot.lane.b32.xlu0 %v1783, 8
        %v1812 = vpop.permute.xlu0 %1811
        %1813 = vrot.lane.b32.xlu0 %v1790, 8
        %v1814 = vpop.permute.xlu0 %1813
        %1815 = vrot.lane.b32.xlu0 %v1797, 8
        %v1816 = vpop.permute.xlu0 %1815
        %1817 = vrot.lane.b32.xlu0 %v1804, 8
        %v1818 = vpop.permute.xlu0 %1817
        %v1826 = vrot.slane %v1748, 1
        %v1827 = vrot.slane %v1749, 1
        %v1828 = vrot.slane %v1750, 1
        %v1829 = vrot.slane %v1751, 1
        %v1830 = vrot.slane %v1752, 1
        %v1831 = vrot.slane %v1753, 1
        %v1832 = vrot.slane %v1754, 1
        %1833 = vrot.lane.b32.xlu0 %v1826, 16
        %v1834 = vpop.permute.xlu0 %1833
        %1835 = vrot.lane.b32.xlu0 %v1827, 16
        %v1836 = vpop.permute.xlu0 %1835
        %1837 = vrot.lane.b32.xlu0 %v1828, 16
        %v1838 = vpop.permute.xlu0 %1837
        %1839 = vrot.lane.b32.xlu0 %v1829, 16
        %v1840 = vpop.permute.xlu0 %1839
        %1841 = vrot.lane.b32.xlu0 %v1830, 16
        %v1842 = vpop.permute.xlu0 %1841
        %1843 = vrot.lane.b32.xlu0 %v1831, 16
        %v1844 = vpop.permute.xlu0 %1843
        %1845 = vrot.lane.b32.xlu0 %v1832, 16
        %v1846 = vpop.permute.xlu0 %1845
        %1848 = vrot.lane.b32.xlu0 %v1748, 24
        %v1849 = vpop.permute.xlu0 %1848
        %1850 = vrot.lane.b32.xlu0 %v1749, 24
        %v1851 = vpop.permute.xlu0 %1850
        %1852 = vrot.lane.b32.xlu0 %v1750, 24
        %v1853 = vpop.permute.xlu0 %1852
        %1854 = vrot.lane.b32.xlu0 %v1751, 24
        %v1855 = vpop.permute.xlu0 %1854
        %1856 = vrot.lane.b32.xlu0 %v1752, 24
        %v1857 = vpop.permute.xlu0 %1856
        %1858 = vrot.lane.b32.xlu0 %v1753, 24
        %v1859 = vpop.permute.xlu0 %1858
        %1860 = vrot.lane.b32.xlu0 %v1754, 24
        %v1861 = vpop.permute.xlu0 %1860
        %1862 = vrot.lane.b32.xlu0 %v1755, 24
        %v1863 = vpop.permute.xlu0 %1862
        %v1865 = vshrl.u32 %v1755, 16
        %v1867 = vshll.u32 %v1755, 16
        %v1869 = vrot.slane %v1867, 1
        %v1870 = vor.u32 %v1865, %v1869
        %1871 = vrot.lane.b32.xlu0 %v1762, 32
        %v1872 = vpop.permute.xlu0 %1871
        %1873 = vrot.lane.b32.xlu0 %v1769, 32
        %v1874 = vpop.permute.xlu0 %1873
        %1875 = vrot.lane.b32.xlu0 %v1776, 32
        %v1876 = vpop.permute.xlu0 %1875
        %1877 = vrot.lane.b32.xlu0 %v1783, 32
        %v1878 = vpop.permute.xlu0 %1877
        %1879 = vrot.lane.b32.xlu0 %v1790, 32
        %v1880 = vpop.permute.xlu0 %1879
        %1881 = vrot.lane.b32.xlu0 %v1797, 32
        %v1882 = vpop.permute.xlu0 %1881
        %1883 = vrot.lane.b32.xlu0 %v1804, 32
        %v1884 = vpop.permute.xlu0 %1883
        %1885 = vrot.lane.b32.xlu0 %v1870, 32
        %v1886 = vpop.permute.xlu0 %1885
        %v1887 = vrot.slane %v1755, 1
        %1888 = vrot.lane.b32.xlu0 %v1826, 40
        %v1889 = vpop.permute.xlu0 %1888
        %1890 = vrot.lane.b32.xlu0 %v1827, 40
        %v1891 = vpop.permute.xlu0 %1890
        %1892 = vrot.lane.b32.xlu0 %v1828, 40
        %v1893 = vpop.permute.xlu0 %1892
        %1894 = vrot.lane.b32.xlu0 %v1829, 40
        %v1895 = vpop.permute.xlu0 %1894
        %1896 = vrot.lane.b32.xlu0 %v1830, 40
        %v1897 = vpop.permute.xlu0 %1896
        %1898 = vrot.lane.b32.xlu0 %v1831, 40
        %v1899 = vpop.permute.xlu0 %1898
        %1900 = vrot.lane.b32.xlu0 %v1832, 40
        %v1901 = vpop.permute.xlu0 %1900
        %1902 = vrot.lane.b32.xlu0 %v1887, 40
        %v1903 = vpop.permute.xlu0 %1902
        %1904 = vrot.lane.b32.xlu0 %v1749, 48
        %v1905 = vpop.permute.xlu0 %1904
        %1906 = vrot.lane.b32.xlu0 %v1750, 48
        %v1907 = vpop.permute.xlu0 %1906
        %1908 = vrot.lane.b32.xlu0 %v1751, 48
        %v1909 = vpop.permute.xlu0 %1908
        %1910 = vrot.lane.b32.xlu0 %v1752, 48
        %v1911 = vpop.permute.xlu0 %1910
        %1912 = vrot.lane.b32.xlu0 %v1753, 48
        %v1913 = vpop.permute.xlu0 %1912
        %1914 = vrot.lane.b32.xlu0 %v1754, 48
        %v1915 = vpop.permute.xlu0 %1914
        %1916 = vrot.lane.b32.xlu0 %v1755, 48
        %v1917 = vpop.permute.xlu0 %1916
        %1918 = vrot.lane.b32.xlu0 %v1769, 56
        %v1919 = vpop.permute.xlu0 %1918
        %1920 = vrot.lane.b32.xlu0 %v1776, 56
        %v1921 = vpop.permute.xlu0 %1920
        %1922 = vrot.lane.b32.xlu0 %v1783, 56
        %v1923 = vpop.permute.xlu0 %1922
        %1924 = vrot.lane.b32.xlu0 %v1790, 56
        %v1925 = vpop.permute.xlu0 %1924
        %1926 = vrot.lane.b32.xlu0 %v1797, 56
        %v1927 = vpop.permute.xlu0 %1926
        %1928 = vrot.lane.b32.xlu0 %v1804, 56
        %v1929 = vpop.permute.xlu0 %1928
        %1930 = vrot.lane.b32.xlu0 %v1870, 56
        %v1931 = vpop.permute.xlu0 %1930
        %1932 = vrot.lane.b32.xlu0 %v1827, 64
        %v1933 = vpop.permute.xlu0 %1932
        %1934 = vrot.lane.b32.xlu0 %v1828, 64
        %v1935 = vpop.permute.xlu0 %1934
        %1936 = vrot.lane.b32.xlu0 %v1829, 64
        %v1937 = vpop.permute.xlu0 %1936
        %1938 = vrot.lane.b32.xlu0 %v1830, 64
        %v1939 = vpop.permute.xlu0 %1938
        %1940 = vrot.lane.b32.xlu0 %v1831, 64
        %v1941 = vpop.permute.xlu0 %1940
        %1942 = vrot.lane.b32.xlu0 %v1832, 64
        %v1943 = vpop.permute.xlu0 %1942
        %1944 = vrot.lane.b32.xlu0 %v1887, 64
        %v1945 = vpop.permute.xlu0 %1944
        %v1947 = vsel %vm713, %v1748, %v1806
        %v1949 = vsel %vm713, %v1749, %v1808
        %v1951 = vsel %vm713, %v1750, %v1810
        %v1953 = vsel %vm713, %v1751, %v1812
        %v1955 = vsel %vm713, %v1752, %v1814
        %v1957 = vsel %vm713, %v1753, %v1816
        %v1959 = vsel %vm713, %v1754, %v1818
        %v1961 = vsel %vm730, %v1947, %v1834
        %v1963 = vsel %vm730, %v1949, %v1836
        %v1965 = vsel %vm730, %v1951, %v1838
        %v1967 = vsel %vm730, %v1953, %v1840
        %v1969 = vsel %vm730, %v1955, %v1842
        %v1971 = vsel %vm730, %v1957, %v1844
        %v1973 = vsel %vm730, %v1959, %v1846
        %v1975 = vsel %vm747, %v1374, %v1849
        %v1977 = vsel %vm747, %v1961, %v1851
        %v1979 = vsel %vm747, %v1963, %v1853
        %v1981 = vsel %vm747, %v1965, %v1855
        %v1983 = vsel %vm747, %v1967, %v1857
        %v1985 = vsel %vm747, %v1969, %v1859
        %v1987 = vsel %vm747, %v1971, %v1861
        %v1989 = vsel %vm747, %v1973, %v1863
        %v1991 = vsel %vm764, %v1975, %v1872
        %v1993 = vsel %vm764, %v1977, %v1874
        %v1995 = vsel %vm764, %v1979, %v1876
        %v1997 = vsel %vm764, %v1981, %v1878
        %v1999 = vsel %vm764, %v1983, %v1880
        %v2001 = vsel %vm764, %v1985, %v1882
        %v2003 = vsel %vm764, %v1987, %v1884
        %v2005 = vsel %vm764, %v1989, %v1886
        %v2007 = vsel %vm781, %v1991, %v1889
        %v2009 = vsel %vm781, %v1993, %v1891
        %v2011 = vsel %vm781, %v1995, %v1893
        %v2013 = vsel %vm781, %v1997, %v1895
        %v2015 = vsel %vm781, %v1999, %v1897
        %v2017 = vsel %vm781, %v2001, %v1899
        %v2019 = vsel %vm781, %v2003, %v1901
        %v2021 = vsel %vm781, %v2005, %v1903
        %v2023 = vsel %vm798, %v2007, %v1905
        %v2025 = vsel %vm798, %v2009, %v1907
        %v2027 = vsel %vm798, %v2011, %v1909
        %v2029 = vsel %vm798, %v2013, %v1911
        %v2031 = vsel %vm798, %v2015, %v1913
        %v2033 = vsel %vm798, %v2017, %v1915
        %v2035 = vsel %vm798, %v2019, %v1917
        %v2036 = vsel %vm798, %v2021, %v1284
        %v2038 = vsel %vm815, %v2023, %v1919
        %v2040 = vsel %vm815, %v2025, %v1921
        %v2042 = vsel %vm815, %v2027, %v1923
        %v2044 = vsel %vm815, %v2029, %v1925
        %v2046 = vsel %vm815, %v2031, %v1927
        %v2048 = vsel %vm815, %v2033, %v1929
        %v2050 = vsel %vm815, %v2035, %v1931
        %v2051 = vsel %vm815, %v2036, %v1300
        %v2053 = vsel %vm832, %v2038, %v1933
        %v2055 = vsel %vm832, %v2040, %v1935
        %v2057 = vsel %vm832, %v2042, %v1937
        %v2059 = vsel %vm832, %v2044, %v1939
        %v2061 = vsel %vm832, %v2046, %v1941
        %v2063 = vsel %vm832, %v2048, %v1943
        %v2065 = vsel %vm832, %v2050, %v1945
        %v2066 = vsel %vm832, %v2051, %v1316
        %v2067 = vld [vmem:[%s4] sm:$0xf]
        %v2068 = vld [vmem:[%s4 + $0x4] sm:$0xf]
        %v2069 = vld [vmem:[%s4 + $0x8] sm:$0xf]
        %v2070 = vld [vmem:[%s4 + $0xc] sm:$0xf]
        %v2071 = vld [vmem:[%s4 + $0x10] sm:$0xf]
        %v2072 = vld [vmem:[%s4 + $0x14] sm:$0xf]
        %v2073 = vld [vmem:[%s4 + $0x18] sm:$0xf]
        %v2074 = vld [vmem:[%s4 + $0x1c] sm:$0xf]
        %v2075 = vld [vmem:[%s4 + $0x20] sm:$0xf]
        %v2076 = vld [vmem:[%s6] sm:$0x1]
        %v2077 = vlaneseq
        %v2078 = vshrl.u32 %v2077, 7
        %v2079 = vsub.s32 0, %v2078
        %v2080 = vrot.slane %v2076, %v2079
        %v2089 = vunpack.c.l.b16 %v2053
        %v2090 = vunpack.c.l.b16 %v2055
        %v2091 = vunpack.c.l.b16 %v2057
        %v2092 = vunpack.c.l.b16 %v2059
        %v2093 = vunpack.c.l.b16 %v2061
        %v2094 = vunpack.c.l.b16 %v2063
        %v2095 = vunpack.c.l.b16 %v2065
        %v2096 = vunpack.c.l.b16 %v2066
        %v2097 = vpack.c.b16 %v2090, %v2089
        %v2098 = vpack.c.b16 %v2092, %v2091
        %v2099 = vpack.c.b16 %v2094, %v2093
        %v2100 = vpack.c.b16 %v2096, %v2095
        %v2110 = vunpack.c.l.b16 %v2067
        %v2111 = vunpack.c.l.b16 %v2068
        %v2112 = vunpack.c.l.b16 %v2069
        %v2113 = vunpack.c.l.b16 %v2070
        %v2114 = vunpack.c.l.b16 %v2071
        %v2115 = vunpack.c.l.b16 %v2072
        %v2116 = vunpack.c.l.b16 %v2073
        %v2117 = vunpack.c.l.b16 %v2074
        %v2118 = vunpack.c.l.b16 %v2075
        %v2119 = vpack.c.b16 %v2111, %v2110
        %v2120 = vpack.c.b16 %v2113, %v2112
        %v2121 = vpack.c.b16 %v2115, %v2114
        %v2122 = vpack.c.b16 %v2117, %v2116
        %v2123 = vpack.c.b16 %v2118, %v2118
        %v2129 = vsel %vm910, %v2097, 0
        %v2132 = vsel %vm910, %v2098, 0
        %v2135 = vsel %vm910, %v2099, 0
        %v2138 = vsel %vm910, %v2100, 0
        %v2141 = vsel %vm923, %v2123, 0
        %2143 = vmatprep.subr.bf16.mxu0 0
        %2144 = vmatpush1.bf16.msra.mxu0 %v2119
        %2145 = vmatprep.subr.bf16.mxu0 0
        %2146 = vmatpush1.bf16.msra.mxu0 %v2120
        %2147 = vmatprep.subr.bf16.mxu0 0
        %2148 = vmatpush1.bf16.msra.mxu0 %v2121
        %2149 = vmatprep.subr.bf16.mxu0 0
        %2150 = vmatpush1.bf16.msra.mxu0 %v2122
        %2151 = vmatprep.subr.bf16.mxu0 0
        %2152 = vmatpush1.bf16.msra.mxu0 %v2141
        %2153 = vmatprep.subr.bf16.mxu0 0
        %2154 = vmatpush1.bf16.msra.mxu0 0
        %2155 = vmatprep.subr.bf16.mxu0 0
        %2156 = vmatpush1.bf16.msra.mxu0 0
        %2157 = vmatprep.subr.bf16.mxu0 0
        %2158 = vmatpush1.bf16.msra.mxu0 0
        %2159 = vmatprep.subr.bf16.mxu0 0
        %2160 = vmatpush1.bf16.msra.mxu0 0
        %2161 = vmatprep.subr.bf16.mxu0 0
        %2162 = vmatpush1.bf16.msra.mxu0 0
        %2163 = vmatprep.subr.bf16.mxu0 0
        %2164 = vmatpush1.bf16.msra.mxu0 0
        %2165 = vmatprep.subr.bf16.mxu0 0
        %2166 = vmatpush1.bf16.msra.mxu0 0
        %2167 = vmatprep.subr.bf16.mxu0 0
        %2168 = vmatpush1.bf16.msra.mxu0 0
        %2169 = vmatprep.subr.bf16.mxu0 0
        %2170 = vmatpush1.bf16.msra.mxu0 0
        %2171 = vmatprep.subr.bf16.mxu0 0
        %2172 = vmatpush1.bf16.msra.mxu0 0
        %2173 = vmatprep.subr.bf16.mxu0 0
        %2174 = vmatpush1.bf16.msra.mxu0 0
        %2175 = vmatprep.mubr.bf16.mxu0 0
        %2176 = vmatmul.mubr.bf16.gmra.mrb[0].mxu0 %v2129
        %v2177 = vpop.f32.mrb[0].mxu0
        %v2178 = vadd.f32 %v2080, %v2177
        %v2179 = vpop.f32.mrb[0].mxu0
        %v2180 = vpop.f32.mrb[0].mxu0
        %v2181 = vadd.f32 %v2080, %v2180
        %v2182 = vpop.f32.mrb[0].mxu0
        %2183 = vmatprep.mubr.bf16.mxu0 0
        %2184 = vmatmul.mubr.bf16.gmra.mrb[0].mxu0 %v2132
        %v2185 = vpop.f32.mrb[0].mxu0
        %v2186 = vadd.f32 %v2080, %v2185
        %v2187 = vpop.f32.mrb[0].mxu0
        %v2188 = vpop.f32.mrb[0].mxu0
        %v2189 = vadd.f32 %v2080, %v2188
        %v2190 = vpop.f32.mrb[0].mxu0
        %2191 = vmatprep.mubr.bf16.mxu0 0
        %2192 = vmatmul.mubr.bf16.gmra.mrb[0].mxu0 %v2135
        %v2193 = vpop.f32.mrb[0].mxu0
        %v2194 = vadd.f32 %v2080, %v2193
        %v2195 = vpop.f32.mrb[0].mxu0
        %v2196 = vpop.f32.mrb[0].mxu0
        %v2197 = vadd.f32 %v2080, %v2196
        %v2198 = vpop.f32.mrb[0].mxu0
        %2199 = vmatprep.mubr.bf16.mxu0 0
        %2200 = vmatmul.mubr.bf16.gmra.mrb[0].mxu0 %v2138
        %v2201 = vpop.f32.mrb[0].mxu0
        %v2202 = vadd.f32 %v2080, %v2201
        %v2203 = vpop.f32.mrb[0].mxu0
        %v2204 = vpop.f32.mrb[0].mxu0
        %v2205 = vadd.f32 %v2080, %v2204
        %v2206 = vpop.f32.mrb[0].mxu0
        %2207 = vdwg.mxu0
        %v2208 = vmax.f32 %v2178, 0.0
        %v2209 = vmax.f32 %v2181, 0.0
        %v2210 = vmax.f32 %v2186, 0.0
        %v2211 = vmax.f32 %v2189, 0.0
        %v2212 = vmax.f32 %v2194, 0.0
        %v2213 = vmax.f32 %v2197, 0.0
        %v2214 = vmax.f32 %v2202, 0.0
        %v2215 = vmax.f32 %v2205, 0.0
        %v2216 = vpack.c.bf16 %v2209, %v2208
        %v2217 = vpack.c.bf16 %v2211, %v2210
        %v2218 = vpack.c.bf16 %v2213, %v2212
        %v2219 = vpack.c.bf16 %v2215, %v2214
        %v2224 = vunpack.c.l.b16 %v2216
        %v2225 = vunpack.c.h.b16 %v2216
        %v2226 = vunpack.c.l.b16 %v2217
        %v2227 = vunpack.c.h.b16 %v2217
        %v2228 = vunpack.c.l.b16 %v2218
        %v2229 = vunpack.c.h.b16 %v2218
        %v2230 = vunpack.c.l.b16 %v2219
        %v2231 = vunpack.c.h.b16 %v2219
        %v2232 = vpack.c.b16 %v2224, %v2224
        %v2233 = vpack.c.b16 %v2225, %v2225
        %v2234 = vpack.c.b16 %v2226, %v2226
        %v2235 = vpack.c.b16 %v2227, %v2227
        %v2236 = vpack.c.b16 %v2228, %v2228
        %v2237 = vpack.c.b16 %v2229, %v2229
        %v2238 = vpack.c.b16 %v2230, %v2230
        %v2239 = vpack.c.b16 %v2231, %v2231
        %v2241 = vshrl.u32 %v2232, 16
        %v2243 = vrot.slane %v2241, 7
        %v2244 = vshll.u32 %v2232, 16
        %v2246 = vor.u32 %v2243, %v2244
        %v2248 = vshrl.u32 %v2233, 16
        %v2250 = vrot.slane %v2248, 7
        %v2251 = vshll.u32 %v2233, 16
        %v2253 = vor.u32 %v2250, %v2251
        %v2255 = vshrl.u32 %v2234, 16
        %v2257 = vrot.slane %v2255, 7
        %v2258 = vshll.u32 %v2234, 16
        %v2260 = vor.u32 %v2257, %v2258
        %v2262 = vshrl.u32 %v2235, 16
        %v2264 = vrot.slane %v2262, 7
        %v2265 = vshll.u32 %v2235, 16
        %v2267 = vor.u32 %v2264, %v2265
        %v2269 = vshrl.u32 %v2236, 16
        %v2271 = vrot.slane %v2269, 7
        %v2272 = vshll.u32 %v2236, 16
        %v2274 = vor.u32 %v2271, %v2272
        %v2276 = vshrl.u32 %v2237, 16
        %v2278 = vrot.slane %v2276, 7
        %v2279 = vshll.u32 %v2237, 16
        %v2281 = vor.u32 %v2278, %v2279
        %v2283 = vshrl.u32 %v2238, 16
        %v2285 = vrot.slane %v2283, 7
        %v2286 = vshll.u32 %v2238, 16
        %v2288 = vor.u32 %v2285, %v2286
        %v2290 = vshrl.u32 %v2239, 16
        %v2292 = vrot.slane %v2290, 7
        %v2293 = vshll.u32 %v2239, 16
        %v2295 = vor.u32 %v2292, %v2293
        %v2304 = vsel %vm432, 0, %v2246
        %v2305 = vsel %vm432, 0, %v2253
        %v2306 = vsel %vm432, 0, %v2260
        %v2307 = vsel %vm432, 0, %v2267
        %v2308 = vsel %vm432, 0, %v2274
        %v2309 = vsel %vm432, 0, %v2281
        %v2310 = vsel %vm432, 0, %v2288
        %v2311 = vsel %vm432, 0, %v2295
        %v2312 = vsel %vm1098, %v2304, 0
        %v2313 = vsel %vm1098, %v2305, 0
        %v2314 = vsel %vm1098, %v2306, 0
        %v2315 = vsel %vm1098, %v2307, 0
        %v2316 = vsel %vm1098, %v2308, 0
        %v2317 = vsel %vm1098, %v2309, 0
        %v2318 = vsel %vm1098, %v2310, 0
        %v2319 = vsel %vm1098, %v2311, 0
        %v2321 = vshrl.u32 %v2312, 16
        %v2323 = vshll.u32 %v2312, 16
        %v2325 = vrot.slane %v2323, 1
        %v2326 = vor.u32 %v2321, %v2325
        %v2328 = vshrl.u32 %v2313, 16
        %v2330 = vshll.u32 %v2313, 16
        %v2332 = vrot.slane %v2330, 1
        %v2333 = vor.u32 %v2328, %v2332
        %v2335 = vshrl.u32 %v2314, 16
        %v2337 = vshll.u32 %v2314, 16
        %v2339 = vrot.slane %v2337, 1
        %v2340 = vor.u32 %v2335, %v2339
        %v2342 = vshrl.u32 %v2315, 16
        %v2344 = vshll.u32 %v2315, 16
        %v2346 = vrot.slane %v2344, 1
        %v2347 = vor.u32 %v2342, %v2346
        %v2349 = vshrl.u32 %v2316, 16
        %v2351 = vshll.u32 %v2316, 16
        %v2353 = vrot.slane %v2351, 1
        %v2354 = vor.u32 %v2349, %v2353
        %v2356 = vshrl.u32 %v2317, 16
        %v2358 = vshll.u32 %v2317, 16
        %v2360 = vrot.slane %v2358, 1
        %v2361 = vor.u32 %v2356, %v2360
        %v2363 = vshrl.u32 %v2318, 16
        %v2365 = vshll.u32 %v2318, 16
        %v2367 = vrot.slane %v2365, 1
        %v2368 = vor.u32 %v2363, %v2367
        %2369 = vrot.lane.b32.xlu0 %v2326, 8
        %v2370 = vpop.permute.xlu0 %2369
        %2371 = vrot.lane.b32.xlu0 %v2333, 8
        %v2372 = vpop.permute.xlu0 %2371
        %2373 = vrot.lane.b32.xlu0 %v2340, 8
        %v2374 = vpop.permute.xlu0 %2373
        %2375 = vrot.lane.b32.xlu0 %v2347, 8
        %v2376 = vpop.permute.xlu0 %2375
        %2377 = vrot.lane.b32.xlu0 %v2354, 8
        %v2378 = vpop.permute.xlu0 %2377
        %2379 = vrot.lane.b32.xlu0 %v2361, 8
        %v2380 = vpop.permute.xlu0 %2379
        %2381 = vrot.lane.b32.xlu0 %v2368, 8
        %v2382 = vpop.permute.xlu0 %2381
        %v2390 = vrot.slane %v2312, 1
        %v2391 = vrot.slane %v2313, 1
        %v2392 = vrot.slane %v2314, 1
        %v2393 = vrot.slane %v2315, 1
        %v2394 = vrot.slane %v2316, 1
        %v2395 = vrot.slane %v2317, 1
        %v2396 = vrot.slane %v2318, 1
        %2397 = vrot.lane.b32.xlu0 %v2390, 16
        %v2398 = vpop.permute.xlu0 %2397
        %2399 = vrot.lane.b32.xlu0 %v2391, 16
        %v2400 = vpop.permute.xlu0 %2399
        %2401 = vrot.lane.b32.xlu0 %v2392, 16
        %v2402 = vpop.permute.xlu0 %2401
        %2403 = vrot.lane.b32.xlu0 %v2393, 16
        %v2404 = vpop.permute.xlu0 %2403
        %2405 = vrot.lane.b32.xlu0 %v2394, 16
        %v2406 = vpop.permute.xlu0 %2405
        %2407 = vrot.lane.b32.xlu0 %v2395, 16
        %v2408 = vpop.permute.xlu0 %2407
        %2409 = vrot.lane.b32.xlu0 %v2396, 16
        %v2410 = vpop.permute.xlu0 %2409
        %2412 = vrot.lane.b32.xlu0 %v2312, 24
        %v2413 = vpop.permute.xlu0 %2412
        %2414 = vrot.lane.b32.xlu0 %v2313, 24
        %v2415 = vpop.permute.xlu0 %2414
        %2416 = vrot.lane.b32.xlu0 %v2314, 24
        %v2417 = vpop.permute.xlu0 %2416
        %2418 = vrot.lane.b32.xlu0 %v2315, 24
        %v2419 = vpop.permute.xlu0 %2418
        %2420 = vrot.lane.b32.xlu0 %v2316, 24
        %v2421 = vpop.permute.xlu0 %2420
        %2422 = vrot.lane.b32.xlu0 %v2317, 24
        %v2423 = vpop.permute.xlu0 %2422
        %2424 = vrot.lane.b32.xlu0 %v2318, 24
        %v2425 = vpop.permute.xlu0 %2424
        %2426 = vrot.lane.b32.xlu0 %v2319, 24
        %v2427 = vpop.permute.xlu0 %2426
        %v2429 = vshrl.u32 %v2319, 16
        %v2431 = vshll.u32 %v2319, 16
        %v2433 = vrot.slane %v2431, 1
        %v2434 = vor.u32 %v2429, %v2433
        %2435 = vrot.lane.b32.xlu0 %v2326, 32
        %v2436 = vpop.permute.xlu0 %2435
        %2437 = vrot.lane.b32.xlu0 %v2333, 32
        %v2438 = vpop.permute.xlu0 %2437
        %2439 = vrot.lane.b32.xlu0 %v2340, 32
        %v2440 = vpop.permute.xlu0 %2439
        %2441 = vrot.lane.b32.xlu0 %v2347, 32
        %v2442 = vpop.permute.xlu0 %2441
        %2443 = vrot.lane.b32.xlu0 %v2354, 32
        %v2444 = vpop.permute.xlu0 %2443
        %2445 = vrot.lane.b32.xlu0 %v2361, 32
        %v2446 = vpop.permute.xlu0 %2445
        %2447 = vrot.lane.b32.xlu0 %v2368, 32
        %v2448 = vpop.permute.xlu0 %2447
        %2449 = vrot.lane.b32.xlu0 %v2434, 32
        %v2450 = vpop.permute.xlu0 %2449
        %v2451 = vrot.slane %v2319, 1
        %2452 = vrot.lane.b32.xlu0 %v2390, 40
        %v2453 = vpop.permute.xlu0 %2452
        %2454 = vrot.lane.b32.xlu0 %v2391, 40
        %v2455 = vpop.permute.xlu0 %2454
        %2456 = vrot.lane.b32.xlu0 %v2392, 40
        %v2457 = vpop.permute.xlu0 %2456
        %2458 = vrot.lane.b32.xlu0 %v2393, 40
        %v2459 = vpop.permute.xlu0 %2458
        %2460 = vrot.lane.b32.xlu0 %v2394, 40
        %v2461 = vpop.permute.xlu0 %2460
        %2462 = vrot.lane.b32.xlu0 %v2395, 40
        %v2463 = vpop.permute.xlu0 %2462
        %2464 = vrot.lane.b32.xlu0 %v2396, 40
        %v2465 = vpop.permute.xlu0 %2464
        %2466 = vrot.lane.b32.xlu0 %v2451, 40
        %v2467 = vpop.permute.xlu0 %2466
        %2468 = vrot.lane.b32.xlu0 %v2313, 48
        %v2469 = vpop.permute.xlu0 %2468
        %2470 = vrot.lane.b32.xlu0 %v2314, 48
        %v2471 = vpop.permute.xlu0 %2470
        %2472 = vrot.lane.b32.xlu0 %v2315, 48
        %v2473 = vpop.permute.xlu0 %2472
        %2474 = vrot.lane.b32.xlu0 %v2316, 48
        %v2475 = vpop.permute.xlu0 %2474
        %2476 = vrot.lane.b32.xlu0 %v2317, 48
        %v2477 = vpop.permute.xlu0 %2476
        %2478 = vrot.lane.b32.xlu0 %v2318, 48
        %v2479 = vpop.permute.xlu0 %2478
        %2480 = vrot.lane.b32.xlu0 %v2319, 48
        %v2481 = vpop.permute.xlu0 %2480
        %2482 = vrot.lane.b32.xlu0 %v2333, 56
        %v2483 = vpop.permute.xlu0 %2482
        %2484 = vrot.lane.b32.xlu0 %v2340, 56
        %v2485 = vpop.permute.xlu0 %2484
        %2486 = vrot.lane.b32.xlu0 %v2347, 56
        %v2487 = vpop.permute.xlu0 %2486
        %2488 = vrot.lane.b32.xlu0 %v2354, 56
        %v2489 = vpop.permute.xlu0 %2488
        %2490 = vrot.lane.b32.xlu0 %v2361, 56
        %v2491 = vpop.permute.xlu0 %2490
        %2492 = vrot.lane.b32.xlu0 %v2368, 56
        %v2493 = vpop.permute.xlu0 %2492
        %2494 = vrot.lane.b32.xlu0 %v2434, 56
        %v2495 = vpop.permute.xlu0 %2494
        %2496 = vrot.lane.b32.xlu0 %v2391, 64
        %v2497 = vpop.permute.xlu0 %2496
        %2498 = vrot.lane.b32.xlu0 %v2392, 64
        %v2499 = vpop.permute.xlu0 %2498
        %2500 = vrot.lane.b32.xlu0 %v2393, 64
        %v2501 = vpop.permute.xlu0 %2500
        %2502 = vrot.lane.b32.xlu0 %v2394, 64
        %v2503 = vpop.permute.xlu0 %2502
        %2504 = vrot.lane.b32.xlu0 %v2395, 64
        %v2505 = vpop.permute.xlu0 %2504
        %2506 = vrot.lane.b32.xlu0 %v2396, 64
        %v2507 = vpop.permute.xlu0 %2506
        %2508 = vrot.lane.b32.xlu0 %v2451, 64
        %v2509 = vpop.permute.xlu0 %2508
        %2510 = vrot.lane.b32.xlu0 %v1668, 72
        %v2511 = vpop.permute.xlu0 %2510
        %2512 = vrot.lane.b32.xlu0 %v1669, 72
        %v2513 = vpop.permute.xlu0 %2512
        %2514 = vrot.lane.b32.xlu0 %v1670, 72
        %v2515 = vpop.permute.xlu0 %2514
        %2516 = vrot.lane.b32.xlu0 %v1671, 72
        %v2517 = vpop.permute.xlu0 %2516
        %2518 = vrot.lane.b32.xlu0 %v1672, 72
        %v2519 = vpop.permute.xlu0 %2518
        %2520 = vrot.lane.b32.xlu0 %v1673, 72
        %v2521 = vpop.permute.xlu0 %2520
        %2522 = vrot.lane.b32.xlu0 %v1674, 72
        %v2523 = vpop.permute.xlu0 %2522
        %2524 = vrot.lane.b32.xlu0 %v1675, 72
        %v2525 = vpop.permute.xlu0 %2524
        %v2527 = vsel %vm713, %v2312, %v2370
        %v2529 = vsel %vm713, %v2313, %v2372
        %v2531 = vsel %vm713, %v2314, %v2374
        %v2533 = vsel %vm713, %v2315, %v2376
        %v2535 = vsel %vm713, %v2316, %v2378
        %v2537 = vsel %vm713, %v2317, %v2380
        %v2539 = vsel %vm713, %v2318, %v2382
        %v2541 = vsel %vm730, %v2527, %v2398
        %v2543 = vsel %vm730, %v2529, %v2400
        %v2545 = vsel %vm730, %v2531, %v2402
        %v2547 = vsel %vm730, %v2533, %v2404
        %v2549 = vsel %vm730, %v2535, %v2406
        %v2551 = vsel %vm730, %v2537, %v2408
        %v2553 = vsel %vm730, %v2539, %v2410
        %v2555 = vsel %vm747, %v1374, %v2413
        %v2557 = vsel %vm747, %v2541, %v2415
        %v2559 = vsel %vm747, %v2543, %v2417
        %v2561 = vsel %vm747, %v2545, %v2419
        %v2563 = vsel %vm747, %v2547, %v2421
        %v2565 = vsel %vm747, %v2549, %v2423
        %v2567 = vsel %vm747, %v2551, %v2425
        %v2569 = vsel %vm747, %v2553, %v2427
        %v2571 = vsel %vm764, %v2555, %v2436
        %v2573 = vsel %vm764, %v2557, %v2438
        %v2575 = vsel %vm764, %v2559, %v2440
        %v2577 = vsel %vm764, %v2561, %v2442
        %v2579 = vsel %vm764, %v2563, %v2444
        %v2581 = vsel %vm764, %v2565, %v2446
        %v2583 = vsel %vm764, %v2567, %v2448
        %v2585 = vsel %vm764, %v2569, %v2450
        %v2587 = vsel %vm781, %v2571, %v2453
        %v2589 = vsel %vm781, %v2573, %v2455
        %v2591 = vsel %vm781, %v2575, %v2457
        %v2593 = vsel %vm781, %v2577, %v2459
        %v2595 = vsel %vm781, %v2579, %v2461
        %v2597 = vsel %vm781, %v2581, %v2463
        %v2599 = vsel %vm781, %v2583, %v2465
        %v2601 = vsel %vm781, %v2585, %v2467
        %v2603 = vsel %vm798, %v2587, %v2469
        %v2605 = vsel %vm798, %v2589, %v2471
        %v2607 = vsel %vm798, %v2591, %v2473
        %v2609 = vsel %vm798, %v2593, %v2475
        %v2611 = vsel %vm798, %v2595, %v2477
        %v2613 = vsel %vm798, %v2597, %v2479
        %v2615 = vsel %vm798, %v2599, %v2481
        %v2616 = vsel %vm798, %v2601, %v1284
        %v2618 = vsel %vm815, %v2603, %v2483
        %v2620 = vsel %vm815, %v2605, %v2485
        %v2622 = vsel %vm815, %v2607, %v2487
        %v2624 = vsel %vm815, %v2609, %v2489
        %v2626 = vsel %vm815, %v2611, %v2491
        %v2628 = vsel %vm815, %v2613, %v2493
        %v2630 = vsel %vm815, %v2615, %v2495
        %v2631 = vsel %vm815, %v2616, %v1300
        %v2633 = vsel %vm832, %v2618, %v2497
        %v2635 = vsel %vm832, %v2620, %v2499
        %v2637 = vsel %vm832, %v2622, %v2501
        %v2639 = vsel %vm832, %v2624, %v2503
        %v2641 = vsel %vm832, %v2626, %v2505
        %v2643 = vsel %vm832, %v2628, %v2507
        %v2645 = vsel %vm832, %v2630, %v2509
        %v2646 = vsel %vm832, %v2631, %v1316
        %v2648 = vsel %vm910, %v2633, %v2511
        %v2650 = vsel %vm910, %v2635, %v2513
        %v2652 = vsel %vm910, %v2637, %v2515
        %v2654 = vsel %vm910, %v2639, %v2517
        %v2656 = vsel %vm910, %v2641, %v2519
        %v2658 = vsel %vm910, %v2643, %v2521
        %v2660 = vsel %vm910, %v2645, %v2523
        %v2662 = vsel %vm910, %v2646, %v2525
        %v2663 = vld [vmem:[%s5] sm:$0xf]
        %v2664 = vld [vmem:[%s5 + $0x4] sm:$0xf]
        %v2665 = vld [vmem:[%s5 + $0x8] sm:$0xf]
        %v2666 = vld [vmem:[%s5 + $0xc] sm:$0xf]
        %v2667 = vld [vmem:[%s5 + $0x10] sm:$0xf]
        %v2668 = vld [vmem:[%s5 + $0x14] sm:$0xf]
        %v2669 = vld [vmem:[%s5 + $0x18] sm:$0xf]
        %v2670 = vld [vmem:[%s5 + $0x1c] sm:$0xf]
        %v2671 = vld [vmem:[%s5 + $0x20] sm:$0xf]
        %v2672 = vld [vmem:[%s5 + $0x24] sm:$0xf]
        %v2673 = vld [vmem:[%s6 + $0x1] sm:$0x1]
        %v2674 = vlaneseq
        %v2675 = vshrl.u32 %v2674, 7
        %v2676 = vsub.s32 0, %v2675
        %v2677 = vrot.slane %v2673, %v2676
        %v2686 = vunpack.c.l.b16 %v2648
        %v2687 = vunpack.c.l.b16 %v2650
        %v2688 = vunpack.c.l.b16 %v2652
        %v2689 = vunpack.c.l.b16 %v2654
        %v2690 = vunpack.c.l.b16 %v2656
        %v2691 = vunpack.c.l.b16 %v2658
        %v2692 = vunpack.c.l.b16 %v2660
        %v2693 = vunpack.c.l.b16 %v2662
        %v2694 = vpack.c.b16 %v2687, %v2686
        %v2695 = vpack.c.b16 %v2689, %v2688
        %v2696 = vpack.c.b16 %v2691, %v2690
        %v2697 = vpack.c.b16 %v2693, %v2692
        %v2708 = vunpack.c.l.b16 %v2663
        %v2709 = vunpack.c.l.b16 %v2664
        %v2710 = vunpack.c.l.b16 %v2665
        %v2711 = vunpack.c.l.b16 %v2666
        %v2712 = vunpack.c.l.b16 %v2667
        %v2713 = vunpack.c.l.b16 %v2668
        %v2714 = vunpack.c.l.b16 %v2669
        %v2715 = vunpack.c.l.b16 %v2670
        %v2716 = vunpack.c.l.b16 %v2671
        %v2717 = vunpack.c.l.b16 %v2672
        %v2718 = vpack.c.b16 %v2709, %v2708
        %v2719 = vpack.c.b16 %v2711, %v2710
        %v2720 = vpack.c.b16 %v2713, %v2712
        %v2721 = vpack.c.b16 %v2715, %v2714
        %v2722 = vpack.c.b16 %v2717, %v2716
        %v2729 = vsel %vm1566, %v2694, 0
        %v2732 = vsel %vm1566, %v2695, 0
        %v2735 = vsel %vm1566, %v2696, 0
        %v2738 = vsel %vm1566, %v2697, 0
        %2740 = vmatprep.subr.bf16.mxu0 0
        %2741 = vmatpush1.bf16.msra.mxu0 %v2718
        %2742 = vmatprep.subr.bf16.mxu0 0
        %2743 = vmatpush1.bf16.msra.mxu0 %v2719
        %2744 = vmatprep.subr.bf16.mxu0 0
        %2745 = vmatpush1.bf16.msra.mxu0 %v2720
        %2746 = vmatprep.subr.bf16.mxu0 0
        %2747 = vmatpush1.bf16.msra.mxu0 %v2721
        %2748 = vmatprep.subr.bf16.mxu0 0
        %2749 = vmatpush1.bf16.msra.mxu0 %v2722
        %2750 = vmatprep.subr.bf16.mxu0 0
        %2751 = vmatpush1.bf16.msra.mxu0 0
        %2752 = vmatprep.subr.bf16.mxu0 0
        %2753 = vmatpush1.bf16.msra.mxu0 0
        %2754 = vmatprep.subr.bf16.mxu0 0
        %2755 = vmatpush1.bf16.msra.mxu0 0
        %2756 = vmatprep.subr.bf16.mxu0 0
        %2757 = vmatpush1.bf16.msra.mxu0 0
        %2758 = vmatprep.subr.bf16.mxu0 0
        %2759 = vmatpush1.bf16.msra.mxu0 0
        %2760 = vmatprep.subr.bf16.mxu0 0
        %2761 = vmatpush1.bf16.msra.mxu0 0
        %2762 = vmatprep.subr.bf16.mxu0 0
        %2763 = vmatpush1.bf16.msra.mxu0 0
        %2764 = vmatprep.subr.bf16.mxu0 0
        %2765 = vmatpush1.bf16.msra.mxu0 0
        %2766 = vmatprep.subr.bf16.mxu0 0
        %2767 = vmatpush1.bf16.msra.mxu0 0
        %2768 = vmatprep.subr.bf16.mxu0 0
        %2769 = vmatpush1.bf16.msra.mxu0 0
        %2770 = vmatprep.subr.bf16.mxu0 0
        %2771 = vmatpush1.bf16.msra.mxu0 0
        %2772 = vmatprep.mubr.bf16.mxu0 0
        %2773 = vmatmul.mubr.bf16.gmra.mrb[0].mxu0 %v2729
        %v2774 = vpop.f32.mrb[0].mxu0
        %v2775 = vadd.f32 %v2677, %v2774
        %v2776 = vpop.f32.mrb[0].mxu0
        %v2777 = vpop.f32.mrb[0].mxu0
        %v2778 = vadd.f32 %v2677, %v2777
        %v2779 = vpop.f32.mrb[0].mxu0
        %2780 = vmatprep.mubr.bf16.mxu0 0
        %2781 = vmatmul.mubr.bf16.gmra.mrb[0].mxu0 %v2732
        %v2782 = vpop.f32.mrb[0].mxu0
        %v2783 = vadd.f32 %v2677, %v2782
        %v2784 = vpop.f32.mrb[0].mxu0
        %v2785 = vpop.f32.mrb[0].mxu0
        %v2786 = vadd.f32 %v2677, %v2785
        %v2787 = vpop.f32.mrb[0].mxu0
        %2788 = vmatprep.mubr.bf16.mxu0 0
        %2789 = vmatmul.mubr.bf16.gmra.mrb[0].mxu0 %v2735
        %v2790 = vpop.f32.mrb[0].mxu0
        %v2791 = vadd.f32 %v2677, %v2790
        %v2792 = vpop.f32.mrb[0].mxu0
        %v2793 = vpop.f32.mrb[0].mxu0
        %v2794 = vadd.f32 %v2677, %v2793
        %v2795 = vpop.f32.mrb[0].mxu0
        %2796 = vmatprep.mubr.bf16.mxu0 0
        %2797 = vmatmul.mubr.bf16.gmra.mrb[0].mxu0 %v2738
        %v2798 = vpop.f32.mrb[0].mxu0
        %v2799 = vadd.f32 %v2677, %v2798
        %v2800 = vpop.f32.mrb[0].mxu0
        %v2801 = vpop.f32.mrb[0].mxu0
        %v2802 = vadd.f32 %v2677, %v2801
        %v2803 = vpop.f32.mrb[0].mxu0
        %2804 = vdwg.mxu0
        %v2805 = vmax.f32 %v2775, 0.0
        %v2806 = vmax.f32 %v2778, 0.0
        %v2807 = vmax.f32 %v2783, 0.0
        %v2808 = vmax.f32 %v2786, 0.0
        %v2809 = vmax.f32 %v2791, 0.0
        %v2810 = vmax.f32 %v2794, 0.0
        %v2811 = vmax.f32 %v2799, 0.0
        %v2812 = vmax.f32 %v2802, 0.0
        %v2813 = vpack.c.bf16 %v2806, %v2805
        %v2814 = vpack.c.bf16 %v2808, %v2807
        %v2815 = vpack.c.bf16 %v2810, %v2809
        %v2816 = vpack.c.bf16 %v2812, %v2811
        %v2821 = vunpack.c.l.b16 %v2813
        %v2822 = vunpack.c.h.b16 %v2813
        %v2823 = vunpack.c.l.b16 %v2814
        %v2824 = vunpack.c.h.b16 %v2814
        %v2825 = vunpack.c.l.b16 %v2815
        %v2826 = vunpack.c.h.b16 %v2815
        %v2827 = vunpack.c.l.b16 %v2816
        %v2828 = vunpack.c.h.b16 %v2816
        %v2829 = vpack.c.b16 %v2821, %v2821
        %v2830 = vpack.c.b16 %v2822, %v2822
        %v2831 = vpack.c.b16 %v2823, %v2823
        %v2832 = vpack.c.b16 %v2824, %v2824
        %v2833 = vpack.c.b16 %v2825, %v2825
        %v2834 = vpack.c.b16 %v2826, %v2826
        %v2835 = vpack.c.b16 %v2827, %v2827
        %v2836 = vpack.c.b16 %v2828, %v2828
        %vm2845 = vcmask 60416
        %2846 = vst.msk [vmem:[%s271] sm:$0xf] %vm2845, %v2829
        %2847 = vst.msk [vmem:[%s271 + $0x4] sm:$0xf] %vm2845, %v2830
        %2848 = vst.msk [vmem:[%s271 + $0x8] sm:$0xf] %vm2845, %v2831
        %2849 = vst.msk [vmem:[%s271 + $0xc] sm:$0xf] %vm2845, %v2832
        %2850 = vst.msk [vmem:[%s271 + $0x10] sm:$0xf] %vm2845, %v2833
        %2851 = vst.msk [vmem:[%s271 + $0x14] sm:$0xf] %vm2845, %v2834
        %2852 = vst.msk [vmem:[%s271 + $0x18] sm:$0xf] %vm2845, %v2835
        %2853 = vst.msk [vmem:[%s271 + $0x1c] sm:$0xf] %vm2845, %v2836
        %s2854 = sand.u32 %s181, 1
        %s2855 = scalar_lea.sflag [#allocation3], %s2854
        %s2856 = sand.u32 %s181, 1
        %s2857 = smul.addr %s2856, 32
        %s2858 = scalar_lea.vmem [#allocation2], %s2857
        // Predicated region
        $region49: #{layer_forward.1} parent=47 // pred_check
          %p2859 = pneg %p191
        $region50: #{layer_forward.1} parent=47 // pred_check_branch
          %2861 = sbr.rel (%p2859) target = $region52
        $region51: #{layer_forward.1} parent=47 // pred_region
          %s2863 = ssub.s32 512, 512
          %2864 = vsyncadd %s2855, %s2863
          %s2865 = smul.addr %s21, 8
          %s2866 = smul.addr %s2865, 64
          %s2867 = scalar_lea.hbm %s7, %s2866
          %s2868 = sshll.u32 %s2858, 4
          %s2869 = int_to_ptr.vmem [resolvable:$true] %s2868
          %2874 = dma.vmem_to_hbm [thread:$0]  %s2869, 512, %s2867, %s2855, 64, 64, 4
        $region52: #{layer_forward.1} parent=47 // pred_fallthru
          _
      $region48: #{layer_forward.1} parent=5 // pred_fallthru
        _
      %p2875 = scmp.le.s32.totalorder 2, %s16
      // Predicated region
      $region53: #{layer_forward.1} parent=5 // pred_check
        %p2876 = pneg %p2875
      $region54: #{layer_forward.1} parent=5 // pred_check_branch
        %2878 = sbr.rel (%p2876) target = $region56
      $region55: #{layer_forward.1} parent=5 // pred_region
        %s2879 = ssub.s32 %s16, 2
        // Predicated region
        $region57: #{layer_forward.1} parent=55 // pred_check
          %p2880 = pneg %p197
        $region58: #{layer_forward.1} parent=55 // pred_check_branch
          %2882 = sbr.rel (%p2880) target = $region60
        $region59: #{layer_forward.1} parent=55 // pred_region
          %s2883 = sand.u32 %s182, 1
          %s2884 = scalar_lea.sflag [#allocation3], %s2883
          %s2885 = sand.u32 %s182, 1
          %s2886 = smul.addr %s2885, 32
          %s2887 = scalar_lea.vmem [#allocation2], %s2886
          %2888 = dma.done %s2884, 512
        $region60: #{layer_forward.1} parent=55 // pred_fallthru
          _
      $region56: #{layer_forward.1} parent=5 // pred_fallthru
        _
    $region6: #{layer_forward.1} parent=1 // loop_footer
      %s20 = sadd.s32 1, %s16
    $region7: #{layer_forward.1} parent=1 // loop_footer_branch
      %15 = sbr.rel target = $region3
    $region8: #{layer_forward.1} parent=1 // loop_exit
      _
    %2889 = vsyncpa [#allocation3], 1
    %s2890 = scalar_lea.sflag [#allocation3], 1
    %2891 = vsyncpa %s2890, 1

</llo_original>
